<compile_context>
chip_gen: v7x
topology: tpu7x:2x2x1
jax: 0.10.0
libtpu: 0.0.40
codegen_flags: <defaults>
</compile_context>

<pallas_src>
import functools

import jax
import jax.numpy as jnp
from jax.experimental import pallas as pl
from jax.experimental.pallas import tpu as pltpu


def _autoencoder_kernel(
    x_ref,            # (TB, D)     input tile
    w1_ref, b1_ref,   # (D, 2), (1, 2)
    w2_ref, b2_ref,   # (2, 1), (1, 1)
    w3_ref, b3_ref,   # (1, 2), (1, 2)
    w4_ref, b4_ref,   # (2, D), (1, D)
    enc_ref,          # (TB, 1)     output: encoded
    dec_ref,          # (TB, D)     output: decoded
):
    # ----- encoder -----
    # Linear(D, 2) -> Dropout (identity, eval) -> ReLU.
    # K = D: MXU. bf16 operands => single-pass matmul; accumulate in f32.
    h1 = jnp.dot(
        x_ref[...].astype(jnp.bfloat16),
        w1_ref[...].astype(jnp.bfloat16),
        preferred_element_type=jnp.float32,
    ) + b1_ref[...]
    h1 = jnp.maximum(h1, 0.0)

    # Linear(2, 1) -> ReLU.  K=2, N=1: VPU broadcast mul + add (no MXU).
    enc = (h1[:, 0:1] * w2_ref[0:1, 0:1]
           + h1[:, 1:2] * w2_ref[1:2, 0:1]
           + b2_ref[...])
    enc = jnp.maximum(enc, 0.0)

    # ----- decoder -----
    # Linear(1, 2) -> Dropout (identity, eval) -> ReLU.  K=1: pure broadcast.
    h2 = jnp.maximum(enc * w3_ref[0:1, :] + b3_ref[...], 0.0)

    # Linear(2, D) -> Sigmoid.  K=2: rank-2 outer-product sum on the VPU.
    logits = (h2[:, 0:1] * w4_ref[0:1, :]
              + h2[:, 1:2] * w4_ref[1:2, :]
              + b4_ref[...])
    # sigmoid(z) = 1 / (1 + exp(-z)): exp and approximate reciprocal both land
    # in the otherwise-idle EUP slot and hide under the output DMA.
    dec = pl.reciprocal(1.0 + jnp.exp(-logits), approx=True)

    enc_ref[...] = enc.astype(enc_ref.dtype)
    dec_ref[...] = dec.astype(dec_ref.dtype)


def _sublane_quantum(dtype):
    """Minimum second-to-last-dim multiple for a VMEM block of this dtype."""
    return {4: 8, 2: 16, 1: 32}.get(jnp.dtype(dtype).itemsize, 8)


@functools.partial(jax.jit, static_argnames=("block_b", "decoded_dtype"))
def autoencoder_forward(x, params, *, block_b=4096, decoded_dtype=None):
    """Full autoencoder forward pass as one gridded, pipelined Pallas kernel."""
    B, D = x.shape
    w1, b1, w2, b2, w3, b3, w4, b4 = params
    dec_dtype = jnp.dtype(decoded_dtype) if decoded_dtype is not None else x.dtype

    # --- batch tile selection ------------------------------------------------
    sub = _sublane_quantum(x.dtype)                 # 8 (f32) / 16 (bf16) / 32 (i8)
    full_rows = pl.cdiv(B, sub) * sub
    TB = min(block_b, full_rows)

    # Keep double-buffered input + decoded tiles under ~24 MiB so the kernel
    # also fits on v7x (64 MiB physical VMEM; limit below is 48 MiB).
    bytes_per_row = D * (jnp.dtype(x.dtype).itemsize + dec_dtype.itemsize)
    vmem_rows = ((24 * 1024 * 1024) // (2 * max(bytes_per_row, 1))) // sub * sub
    TB = max(sub, min(TB, max(vmem_rows, sub)))

    # If the whole batch fits in one tile, split it in two so the "parallel"
    # batch axis can be sharded across both TensorCores on v7x.
    if TB >= B and B >= 2 * sub:
        TB = pl.cdiv(pl.cdiv(B, 2), sub) * sub

    grid = (pl.cdiv(B, TB),)                        # ragged last block handled by Pallas

    # Tiny weights/biases: untiled, VMEM-resident for the whole call.
    resident = pl.BlockSpec(memory_space=pltpu.MemorySpace.VMEM)

    enc, dec = pl.pallas_call(
        _autoencoder_kernel,
        out_shape=(
            jax.ShapeDtypeStruct((B, 1), x.dtype),
            jax.ShapeDtypeStruct((B, D), dec_dtype),
        ),
        grid=grid,
        in_specs=[pl.BlockSpec((TB, D), lambda i: (i, 0))] + [resident] * 8,
        out_specs=(
            pl.BlockSpec((TB, 1), lambda i: (i, 0)),
            pl.BlockSpec((TB, D), lambda i: (i, 0)),
        ),
        compiler_params=pltpu.CompilerParams(
            dimension_semantics=("parallel",),
            vmem_limit_bytes=48 * 1024 * 1024,
        ),
    )(x, w1, b1, w2, b2, w3, b3, w4, b4)
    return enc, dec


def init_params(key, input_shape):
    """Deterministic init mimicking nn.Linear's U(-1/sqrt(fan_in), 1/sqrt(fan_in)).

    Weights stored as [in_features, out_features] (transposed vs PyTorch);
    biases stored as [1, out_features] for clean in-kernel broadcasting.
    """
    def linear(key, fan_in, fan_out):
        kw, kb = jax.random.split(key)
        bound = 1.0 / jnp.sqrt(jnp.float32(fan_in))
        w = jax.random.uniform(kw, (fan_in, fan_out), jnp.float32, -bound, bound)
        b = jax.random.uniform(kb, (1, fan_out), jnp.float32, -bound, bound)
        return w, b

    k1, k2, k3, k4 = jax.random.split(key, 4)
    w1, b1 = linear(k1, input_shape, 2)   # encoder Linear(input_shape, 2)
    w2, b2 = linear(k2, 2, 1)             # encoder Linear(2, 1)
    w3, b3 = linear(k3, 1, 2)             # decoder Linear(1, 2)
    w4, b4 = linear(k4, 2, input_shape)   # decoder Linear(2, input_shape)
    return (w1, b1, w2, b2, w3, b3, w4, b4)


if __name__ == "__main__":
    BATCH = 200          # non-multiple of the tile to exercise the ragged-block path
    INPUT_SHAPE = 128    # lane-dense decoded output (last dim multiple of 128)
    BLOCK_B = 128        # 2 grid steps -> pipelining + ragged last block exercised

    key = jax.random.PRNGKey(0)
    kx, kp = jax.random.split(key)
    x = jax.random.uniform(kx, (BATCH, INPUT_SHAPE), jnp.float32)
    params = init_params(kp, INPUT_SHAPE)

    encoded, decoded = autoencoder_forward(x, params, block_b=BLOCK_B)
    jax.block_until_ready((encoded, decoded))

    assert encoded.shape == (BATCH, 1), encoded.shape
    assert decoded.shape == (BATCH, INPUT_SHAPE), decoded.shape

    # Reference forward pass. The first matmul uses the same bf16 operands as the
    # kernel so the only remaining deltas are accumulation order and the EUP
    # approximate-reciprocal in the sigmoid (hence the decoded tolerance).
    w1, b1, w2, b2, w3, b3, w4, b4 = params
    h1 = jnp.maximum(
        jnp.dot(x.astype(jnp.bfloat16), w1.astype(jnp.bfloat16),
                preferred_element_type=jnp.float32) + b1, 0.0)
    enc_ref = jnp.maximum(h1 @ w2 + b2, 0.0)
    h2 = jnp.maximum(enc_ref @ w3 + b3, 0.0)
    dec_ref = jax.nn.sigmoid(h2 @ w4 + b4)
    assert jnp.allclose(encoded, enc_ref, atol=1e-4), "encoded mismatch"
    assert jnp.allclose(decoded, dec_ref, atol=5e-3), "decoded mismatch"

    print("KERNEL_OK")
</pallas_src>

<mosaic_0001>
module attributes {stable_mosaic.version = 11 : i64} {
  func.func @_autoencoder_kernel(%arg0: i32, %arg1: memref<128x128xf32, #tpu.memory_space<vmem>>, %arg2: memref<128x2xf32, #tpu.memory_space<vmem>>, %arg3: memref<1x2xf32, #tpu.memory_space<vmem>>, %arg4: memref<2x1xf32, #tpu.memory_space<vmem>>, %arg5: memref<1x1xf32, #tpu.memory_space<vmem>>, %arg6: memref<1x2xf32, #tpu.memory_space<vmem>>, %arg7: memref<1x2xf32, #tpu.memory_space<vmem>>, %arg8: memref<2x128xf32, #tpu.memory_space<vmem>>, %arg9: memref<1x128xf32, #tpu.memory_space<vmem>>, %arg10: memref<128x1xf32, #tpu.memory_space<vmem>>, %arg11: memref<128x128xf32, #tpu.memory_space<vmem>>) attributes {dimension_semantics = [#tpu.dimension_semantics<parallel>], iteration_bounds = array<i64: 2>, scalar_prefetch = 0 : i64, scratch_operands = 0 : i64, tpu.core_type = #tpu.core_type<tc>, window_params = [{transform_indices = @transform_0, window_bounds = array<i64: 128, 128>}, {pipeline_mode = #tpu.pipeline_mode<synchronous>, transform_indices = @transform_1, window_bounds = array<i64: 128, 2>}, {pipeline_mode = #tpu.pipeline_mode<synchronous>, transform_indices = @transform_2, window_bounds = array<i64: 1, 2>}, {pipeline_mode = #tpu.pipeline_mode<synchronous>, transform_indices = @transform_3, window_bounds = array<i64: 2, 1>}, {pipeline_mode = #tpu.pipeline_mode<synchronous>, transform_indices = @transform_4, window_bounds = array<i64: 1, 1>}, {pipeline_mode = #tpu.pipeline_mode<synchronous>, transform_indices = @transform_5, window_bounds = array<i64: 1, 2>}, {pipeline_mode = #tpu.pipeline_mode<synchronous>, transform_indices = @transform_6, window_bounds = array<i64: 1, 2>}, {pipeline_mode = #tpu.pipeline_mode<synchronous>, transform_indices = @transform_7, window_bounds = array<i64: 2, 128>}, {pipeline_mode = #tpu.pipeline_mode<synchronous>, transform_indices = @transform_8, window_bounds = array<i64: 1, 128>}, {transform_indices = @transform_9, window_bounds = array<i64: 128, 1>}, {transform_indices = @transform_10, window_bounds = array<i64: 128, 128>}]} {
    %c0 = arith.constant 0 : index
    %c0_0 = arith.constant 0 : index
    %0 = vector.load %arg1[%c0, %c0_0] : memref<128x128xf32, #tpu.memory_space<vmem>>, vector<128x128xf32>
    %1 = arith.truncf %0 : vector<128x128xf32> to vector<128x128xbf16>
    %c0_1 = arith.constant 0 : index
    %c0_2 = arith.constant 0 : index
    %2 = vector.load %arg2[%c0_1, %c0_2] : memref<128x2xf32, #tpu.memory_space<vmem>>, vector<128x2xf32>
    %3 = arith.truncf %2 : vector<128x2xf32> to vector<128x2xbf16>
    %cst = arith.constant dense<0.000000e+00> : vector<128x2xf32>
    %4 = tpu.matmul %1, %3, %cst {dimension_numbers = #tpu.dot_dimension_numbers<[1], [0], [0], [1], [0, 0, 1, 1], [], []>} : vector<128x128xbf16>, vector<128x2xbf16>, vector<128x2xf32> -> vector<128x2xf32>
    %c0_3 = arith.constant 0 : index
    %c0_4 = arith.constant 0 : index
    %5 = vector.load %arg3[%c0_3, %c0_4] : memref<1x2xf32, #tpu.memory_space<vmem>>, vector<1x2xf32>
    %6 = vector.broadcast %5 : vector<1x2xf32> to vector<128x2xf32>
    %7 = arith.addf %4, %6 : vector<128x2xf32>
    %cst_5 = arith.constant 0.000000e+00 : f32
    %8 = vector.broadcast %cst_5 : f32 to vector<128x2xf32>
    %9 = arith.maximumf %7, %8 : vector<128x2xf32>
    %10 = vector.extract_strided_slice %9 {offsets = [0, 0], sizes = [128, 1], strides = [1, 1]} : vector<128x2xf32> to vector<128x1xf32>
    %c0_6 = arith.constant 0 : index
    %c0_7 = arith.constant 0 : index
    %11 = vector.load %arg4[%c0_6, %c0_7] : memref<2x1xf32, #tpu.memory_space<vmem>>, vector<1x1xf32>
    %12 = vector.broadcast %11 : vector<1x1xf32> to vector<128x1xf32>
    %13 = arith.mulf %10, %12 : vector<128x1xf32>
    %14 = vector.extract_strided_slice %9 {offsets = [0, 1], sizes = [128, 1], strides = [1, 1]} : vector<128x2xf32> to vector<128x1xf32>
    %c1 = arith.constant 1 : index
    %c0_8 = arith.constant 0 : index
    %15 = vector.load %arg4[%c1, %c0_8] : memref<2x1xf32, #tpu.memory_space<vmem>>, vector<1x1xf32>
    %16 = vector.broadcast %15 : vector<1x1xf32> to vector<128x1xf32>
    %17 = arith.mulf %14, %16 : vector<128x1xf32>
    %18 = arith.addf %13, %17 : vector<128x1xf32>
    %c0_9 = arith.constant 0 : index
    %c0_10 = arith.constant 0 : index
    %19 = vector.load %arg5[%c0_9, %c0_10] : memref<1x1xf32, #tpu.memory_space<vmem>>, vector<1x1xf32>
    %20 = vector.broadcast %19 : vector<1x1xf32> to vector<128x1xf32>
    %21 = arith.addf %18, %20 : vector<128x1xf32>
    %cst_11 = arith.constant 0.000000e+00 : f32
    %22 = vector.broadcast %cst_11 : f32 to vector<128x1xf32>
    %23 = arith.maximumf %21, %22 : vector<128x1xf32>
    %c0_12 = arith.constant 0 : index
    %c0_13 = arith.constant 0 : index
    %24 = vector.load %arg6[%c0_12, %c0_13] : memref<1x2xf32, #tpu.memory_space<vmem>>, vector<1x2xf32>
    %25 = vector.broadcast %23 : vector<128x1xf32> to vector<128x2xf32>
    %26 = vector.broadcast %24 : vector<1x2xf32> to vector<128x2xf32>
    %27 = arith.mulf %25, %26 : vector<128x2xf32>
    %c0_14 = arith.constant 0 : index
    %c0_15 = arith.constant 0 : index
    %28 = vector.load %arg7[%c0_14, %c0_15] : memref<1x2xf32, #tpu.memory_space<vmem>>, vector<1x2xf32>
    %29 = vector.broadcast %28 : vector<1x2xf32> to vector<128x2xf32>
    %30 = arith.addf %27, %29 : vector<128x2xf32>
    %cst_16 = arith.constant 0.000000e+00 : f32
    %31 = vector.broadcast %cst_16 : f32 to vector<128x2xf32>
    %32 = arith.maximumf %30, %31 : vector<128x2xf32>
    %33 = vector.extract_strided_slice %32 {offsets = [0, 0], sizes = [128, 1], strides = [1, 1]} : vector<128x2xf32> to vector<128x1xf32>
    %c0_17 = arith.constant 0 : index
    %c0_18 = arith.constant 0 : index
    %34 = vector.load %arg8[%c0_17, %c0_18] : memref<2x128xf32, #tpu.memory_space<vmem>>, vector<1x128xf32>
    %35 = vector.broadcast %33 : vector<128x1xf32> to vector<128x128xf32>
    %36 = vector.broadcast %34 : vector<1x128xf32> to vector<128x128xf32>
    %37 = arith.mulf %35, %36 : vector<128x128xf32>
    %38 = vector.extract_strided_slice %32 {offsets = [0, 1], sizes = [128, 1], strides = [1, 1]} : vector<128x2xf32> to vector<128x1xf32>
    %c1_19 = arith.constant 1 : index
    %c0_20 = arith.constant 0 : index
    %39 = vector.load %arg8[%c1_19, %c0_20] : memref<2x128xf32, #tpu.memory_space<vmem>>, vector<1x128xf32>
    %40 = vector.broadcast %38 : vector<128x1xf32> to vector<128x128xf32>
    %41 = vector.broadcast %39 : vector<1x128xf32> to vector<128x128xf32>
    %42 = arith.mulf %40, %41 : vector<128x128xf32>
    %43 = arith.addf %37, %42 : vector<128x128xf32>
    %c0_21 = arith.constant 0 : index
    %c0_22 = arith.constant 0 : index
    %44 = vector.load %arg9[%c0_21, %c0_22] : memref<1x128xf32, #tpu.memory_space<vmem>>, vector<1x128xf32>
    %45 = vector.broadcast %44 : vector<1x128xf32> to vector<128x128xf32>
    %46 = arith.addf %43, %45 : vector<128x128xf32>
    %cst_23 = arith.constant 0.000000e+00 : f32
    %47 = vector.broadcast %cst_23 : f32 to vector<128x128xf32>
    %48 = arith.subf %47, %46 : vector<128x128xf32>
    %49 = math.exp %48 : vector<128x128xf32>
    %cst_24 = arith.constant 1.000000e+00 : f32
    %50 = vector.broadcast %cst_24 : f32 to vector<128x128xf32>
    %51 = arith.addf %50, %49 : vector<128x128xf32>
    %52 = tpu.reciprocal %51 {approx = true} : vector<128x128xf32> -> vector<128x128xf32>
    %c0_25 = arith.constant 0 : index
    %c0_26 = arith.constant 0 : index
    %53 = vector.load %arg10[%c0_25, %c0_26] : memref<128x1xf32, #tpu.memory_space<vmem>>, vector<128x1xf32>
    tpu.vector_store %arg10[%c0_25, %c0_26], %23 {strides = array<i32>} : memref<128x1xf32, #tpu.memory_space<vmem>>, vector<128x1xf32>,
    %c0_27 = arith.constant 0 : index
    %c0_28 = arith.constant 0 : index
    %54 = vector.load %arg11[%c0_27, %c0_28] : memref<128x128xf32, #tpu.memory_space<vmem>>, vector<128x128xf32>
    tpu.vector_store %arg11[%c0_27, %c0_28], %52 {strides = array<i32>} : memref<128x128xf32, #tpu.memory_space<vmem>>, vector<128x128xf32>,
    return
  }
  func.func @transform_0(%arg0: i32) -> (i32, i32) {
    %c0_i32 = arith.constant 0 : i32
    %c0_i32_0 = arith.constant 0 : i32
    return %arg0, %c0_i32 : i32, i32
  }
  func.func @transform_1(%arg0: i32) -> (i32, i32) {
    %c0_i32 = arith.constant 0 : i32
    %c0_i32_0 = arith.constant 0 : i32
    %c0_i32_1 = arith.constant 0 : i32
    return %c0_i32, %c0_i32_0 : i32, i32
  }
  func.func @transform_2(%arg0: i32) -> (i32, i32) {
    %c0_i32 = arith.constant 0 : i32
    %c0_i32_0 = arith.constant 0 : i32
    %c0_i32_1 = arith.constant 0 : i32
    return %c0_i32, %c0_i32_0 : i32, i32
  }
  func.func @transform_3(%arg0: i32) -> (i32, i32) {
    %c0_i32 = arith.constant 0 : i32
    %c0_i32_0 = arith.constant 0 : i32
    %c0_i32_1 = arith.constant 0 : i32
    return %c0_i32, %c0_i32_0 : i32, i32
  }
  func.func @transform_4(%arg0: i32) -> (i32, i32) {
    %c0_i32 = arith.constant 0 : i32
    %c0_i32_0 = arith.constant 0 : i32
    %c0_i32_1 = arith.constant 0 : i32
    return %c0_i32, %c0_i32_0 : i32, i32
  }
  func.func @transform_5(%arg0: i32) -> (i32, i32) {
    %c0_i32 = arith.constant 0 : i32
    %c0_i32_0 = arith.constant 0 : i32
    %c0_i32_1 = arith.constant 0 : i32
    return %c0_i32, %c0_i32_0 : i32, i32
  }
  func.func @transform_6(%arg0: i32) -> (i32, i32) {
    %c0_i32 = arith.constant 0 : i32
    %c0_i32_0 = arith.constant 0 : i32
    %c0_i32_1 = arith.constant 0 : i32
    return %c0_i32, %c0_i32_0 : i32, i32
  }
  func.func @transform_7(%arg0: i32) -> (i32, i32) {
    %c0_i32 = arith.constant 0 : i32
    %c0_i32_0 = arith.constant 0 : i32
    %c0_i32_1 = arith.constant 0 : i32
    return %c0_i32, %c0_i32_0 : i32, i32
  }
  func.func @transform_8(%arg0: i32) -> (i32, i32) {
    %c0_i32 = arith.constant 0 : i32
    %c0_i32_0 = arith.constant 0 : i32
    %c0_i32_1 = arith.constant 0 : i32
    return %c0_i32, %c0_i32_0 : i32, i32
  }
  func.func @transform_9(%arg0: i32) -> (i32, i32) {
    %c0_i32 = arith.constant 0 : i32
    %c0_i32_0 = arith.constant 0 : i32
    return %arg0, %c0_i32 : i32, i32
  }
  func.func @transform_10(%arg0: i32) -> (i32, i32) {
    %c0_i32 = arith.constant 0 : i32
    %c0_i32_0 = arith.constant 0 : i32
    return %arg0, %c0_i32 : i32, i32
  }
}

</mosaic_0001>

<llo_original>
// kernel: autoencoder_forward.1
$region0: #{autoencoder_forward.1}
  #allocation0 [shape = 'u32[]', space=smem, size = 0x4, offset = 0x4, fixed_abs, tag = 'smem constant byte address 0x4 - core index']
  #allocation1 [shape = 'u32[144,128]{1,0:T(1,128)}', space=vmem, size = 0x12000, scoped, tag = 'internal scratch']
  #allocation2 [shape = 'f32[1,1]{1,0:T(1,128)S(1)}', space=vmem, size = 0x200, scoped, tag = 'scoped memory for autoencoder_forward.1']
  %s0 = inlined_call_operand.hbm [shape: f32[200,128], index: 0, kind: input, shape index: {}]
  %s1 = inlined_call_operand.vmem [shape: f32[128,2], index: 1, kind: input, shape index: {}]
  %s2 = inlined_call_operand.vmem [shape: f32[1,2], index: 2, kind: input, shape index: {}]
  %s3 = inlined_call_operand.vmem [shape: f32[2,1], index: 3, kind: input, shape index: {}]
  %s4 = inlined_call_operand.<no memory space> [shape: f32[1,1], index: 4, kind: input, shape index: {}]
  %s5 = inlined_call_operand.vmem [shape: f32[1,2], index: 5, kind: input, shape index: {}]
  %s6 = inlined_call_operand.vmem [shape: f32[1,2], index: 6, kind: input, shape index: {}]
  %s7 = inlined_call_operand.vmem [shape: f32[2,128], index: 7, kind: input, shape index: {}]
  %s8 = inlined_call_operand.vmem [shape: f32[1,128], index: 8, kind: input, shape index: {}]
  %s9 = inlined_call_operand.vmem [shape: f32[200,1], index: 9, kind: output, shape index: {0}]
  %s10 = inlined_call_operand.hbm [shape: f32[200,128], index: 10, kind: output, shape index: {1}]
  %11 = xla_tuple %s9, %s10
  %s12 = sld [smem:[#allocation0]]
  $region129: #{autoencoder_forward.1} parent=0
    _
  %s14 = ssub.s32 1, %s12
  %s15 = scalar_select 0, %s14, %s12
  %v16 = vstv %s4
  %17 = vst [vmem:[#allocation2] sm:$0x1] %v16
  $region1: #{autoencoder_forward.1} parent=0
    #allocation3 [shape = 'u8[131072]{0}', space=vmem, size = 0x20000, scoped, tag = 'input window, operand 0']
    #allocation4 [shape = 's32[2]{0}', space=sflag, size = 0x8, scoped, tag = 'scoped memory for autoencoder_forward.1']
    #allocation5 [shape = 's32[2]{0}', space=sflag, size = 0x8, scoped, tag = 'scoped memory for autoencoder_forward.1']
    #allocation6 [shape = 'u8[131072]{0}', space=vmem, size = 0x20000, scoped, tag = 'output window, operand 0']
    #allocation7 [shape = 'u8[131072]{0}', space=vmem, size = 0x20000, scoped, tag = 'output window, operand 1']
    %18 = vsyncpa [#allocation4], 0
    %s19 = scalar_lea.sflag [#allocation4], 1
    %20 = vsyncpa %s19, 0
    %21 = vsyncpa [#allocation5], 0
    %s22 = scalar_lea.sflag [#allocation5], 1
    %23 = vsyncpa %s22, 0
    loop: start=0, step=1, limit=4
    $region2: #{autoencoder_forward.1} parent=1 // loop_pre_header
      _
    $region3: #{autoencoder_forward.1} parent=1 // loop_header
      %s25 = sphi 0, %s29
      %p26 = scmp.ge.s32.totalorder %s25, 4
      %s35 = sphi 0, %s37
      %s38 = sphi 0, %s35
      %s39 = sphi 0, %s38
      %s55 = sphi 0, %s39
      %s59 = sphi 0, %s59
      %s61 = sphi 0, %s59
      %s62 = sphi 0, %s61
      %s76 = sphi 0, %s62
      %s80 = sphi 0, %s80
      %s82 = sphi 0, %s80
      %s83 = sphi 0, %s82
      %s97 = sphi 0, %s83
      %s101 = sphi 0, %s101
      %s103 = sphi 0, %s101
      %s104 = sphi 0, %s103
      %s118 = sphi 0, %s104
      %s122 = sphi 0, %s122
      %s124 = sphi 0, %s122
      %s125 = sphi 0, %s124
      %s139 = sphi 0, %s125
      %s143 = sphi 0, %s143
      %s145 = sphi 0, %s143
      %s146 = sphi 0, %s145
      %s160 = sphi 0, %s146
      %s164 = sphi 0, %s164
      %s166 = sphi 0, %s164
      %s167 = sphi 0, %s166
      %s181 = sphi 0, %s167
      %s185 = sphi 0, %s185
      %s187 = sphi 0, %s185
      %s188 = sphi 0, %s187
      %s202 = sphi 0, %s188
      %s206 = sphi 0, %s206
      %s208 = sphi 0, %s206
      %s209 = sphi 0, %s208
      %s223 = sphi 0, %s209
      %s229 = sphi 0, %s231
      %s232 = sphi 0, %s229
      %s233 = sphi 0, %s232
      %s249 = sphi 0, %s233
      %s255 = sphi 0, %s257
      %s258 = sphi 0, %s255
      %s259 = sphi 0, %s258
      %s275 = sphi 0, %s259
    $region4: #{autoencoder_forward.1} parent=1 // loop_header_branch
      %28 = sbr.rel (%p26) target = $region8
    $region5: #{autoencoder_forward.1} parent=1 // loop_body
      %s30 = ssub.s32 %s25, 1
      %s31 = ssub.s32 %s25, 2
      %s32 = sadd.s32 %s25, 1
      %s33 = ssub.s32 %s25, %s32
      %p34 = scmp.eq.s32.totalorder %s33, 0
      %s36 = sadd.s32 %s35, 1
      %s37 = scalar_select %p34, %s35, %s36
      %p40 = pneg %p34
      %p41 = scmp.eq.s32.totalorder %s25, 1
      %p42 = por %p40, %p41
      %p43 = scmp.ne.s32.totalorder %s35, %s38
      %p44 = scmp.eq.s32.totalorder %s25, 0
      %p45 = por %p43, %p44
      %p46 = scmp.ne.s32.totalorder %s35, %s38
      %p47 = scmp.eq.s32.totalorder %s30, 1
      %p48 = por %p46, %p47
      %p49 = scmp.ne.s32.totalorder %s38, %s39
      %p50 = scmp.eq.s32.totalorder %s30, 0
      %p51 = por %p49, %p50
      %p52 = scmp.ne.s32.totalorder %s38, %s39
      %p53 = scmp.eq.s32.totalorder %s31, 1
      %p54 = por %p52, %p53
      %p56 = scmp.ne.s32.totalorder %s39, %s55
      %p57 = scmp.eq.s32.totalorder %s31, 0
      %p58 = por %p56, %p57
      %s60 = sadd.s32 %s59, 1
      %p63 = scmp.eq.s32.totalorder %s25, 1
      %p64 = scmp.ne.s32.totalorder %s59, %s61
      %p65 = scmp.eq.s32.totalorder %s25, 0
      %p66 = por %p64, %p65
      %p67 = scmp.ne.s32.totalorder %s59, %s61
      %p68 = scmp.eq.s32.totalorder %s30, 1
      %p69 = por %p67, %p68
      %p70 = scmp.ne.s32.totalorder %s61, %s62
      %p71 = scmp.eq.s32.totalorder %s30, 0
      %p72 = por %p70, %p71
      %p73 = scmp.ne.s32.totalorder %s61, %s62
      %p74 = scmp.eq.s32.totalorder %s31, 1
      %p75 = por %p73, %p74
      %p77 = scmp.ne.s32.totalorder %s62, %s76
      %p78 = scmp.eq.s32.totalorder %s31, 0
      %p79 = por %p77, %p78
      %s81 = sadd.s32 %s80, 1
      %p84 = scmp.eq.s32.totalorder %s25, 1
      %p85 = scmp.ne.s32.totalorder %s80, %s82
      %p86 = scmp.eq.s32.totalorder %s25, 0
      %p87 = por %p85, %p86
      %p88 = scmp.ne.s32.totalorder %s80, %s82
      %p89 = scmp.eq.s32.totalorder %s30, 1
      %p90 = por %p88, %p89
      %p91 = scmp.ne.s32.totalorder %s82, %s83
      %p92 = scmp.eq.s32.totalorder %s30, 0
      %p93 = por %p91, %p92
      %p94 = scmp.ne.s32.totalorder %s82, %s83
      %p95 = scmp.eq.s32.totalorder %s31, 1
      %p96 = por %p94, %p95
      %p98 = scmp.ne.s32.totalorder %s83, %s97
      %p99 = scmp.eq.s32.totalorder %s31, 0
      %p100 = por %p98, %p99
      %s102 = sadd.s32 %s101, 1
      %p105 = scmp.eq.s32.totalorder %s25, 1
      %p106 = scmp.ne.s32.totalorder %s101, %s103
      %p107 = scmp.eq.s32.totalorder %s25, 0
      %p108 = por %p106, %p107
      %p109 = scmp.ne.s32.totalorder %s101, %s103
      %p110 = scmp.eq.s32.totalorder %s30, 1
      %p111 = por %p109, %p110
      %p112 = scmp.ne.s32.totalorder %s103, %s104
      %p113 = scmp.eq.s32.totalorder %s30, 0
      %p114 = por %p112, %p113
      %p115 = scmp.ne.s32.totalorder %s103, %s104
      %p116 = scmp.eq.s32.totalorder %s31, 1
      %p117 = por %p115, %p116
      %p119 = scmp.ne.s32.totalorder %s104, %s118
      %p120 = scmp.eq.s32.totalorder %s31, 0
      %p121 = por %p119, %p120
      %s123 = sadd.s32 %s122, 1
      %p126 = scmp.eq.s32.totalorder %s25, 1
      %p127 = scmp.ne.s32.totalorder %s122, %s124
      %p128 = scmp.eq.s32.totalorder %s25, 0
      %p129 = por %p127, %p128
      %p130 = scmp.ne.s32.totalorder %s122, %s124
      %p131 = scmp.eq.s32.totalorder %s30, 1
      %p132 = por %p130, %p131
      %p133 = scmp.ne.s32.totalorder %s124, %s125
      %p134 = scmp.eq.s32.totalorder %s30, 0
      %p135 = por %p133, %p134
      %p136 = scmp.ne.s32.totalorder %s124, %s125
      %p137 = scmp.eq.s32.totalorder %s31, 1
      %p138 = por %p136, %p137
      %p140 = scmp.ne.s32.totalorder %s125, %s139
      %p141 = scmp.eq.s32.totalorder %s31, 0
      %p142 = por %p140, %p141
      %s144 = sadd.s32 %s143, 1
      %p147 = scmp.eq.s32.totalorder %s25, 1
      %p148 = scmp.ne.s32.totalorder %s143, %s145
      %p149 = scmp.eq.s32.totalorder %s25, 0
      %p150 = por %p148, %p149
      %p151 = scmp.ne.s32.totalorder %s143, %s145
      %p152 = scmp.eq.s32.totalorder %s30, 1
      %p153 = por %p151, %p152
      %p154 = scmp.ne.s32.totalorder %s145, %s146
      %p155 = scmp.eq.s32.totalorder %s30, 0
      %p156 = por %p154, %p155
      %p157 = scmp.ne.s32.totalorder %s145, %s146
      %p158 = scmp.eq.s32.totalorder %s31, 1
      %p159 = por %p157, %p158
      %p161 = scmp.ne.s32.totalorder %s146, %s160
      %p162 = scmp.eq.s32.totalorder %s31, 0
      %p163 = por %p161, %p162
      %s165 = sadd.s32 %s164, 1
      %p168 = scmp.eq.s32.totalorder %s25, 1
      %p169 = scmp.ne.s32.totalorder %s164, %s166
      %p170 = scmp.eq.s32.totalorder %s25, 0
      %p171 = por %p169, %p170
      %p172 = scmp.ne.s32.totalorder %s164, %s166
      %p173 = scmp.eq.s32.totalorder %s30, 1
      %p174 = por %p172, %p173
      %p175 = scmp.ne.s32.totalorder %s166, %s167
      %p176 = scmp.eq.s32.totalorder %s30, 0
      %p177 = por %p175, %p176
      %p178 = scmp.ne.s32.totalorder %s166, %s167
      %p179 = scmp.eq.s32.totalorder %s31, 1
      %p180 = por %p178, %p179
      %p182 = scmp.ne.s32.totalorder %s167, %s181
      %p183 = scmp.eq.s32.totalorder %s31, 0
      %p184 = por %p182, %p183
      %s186 = sadd.s32 %s185, 1
      %p189 = scmp.eq.s32.totalorder %s25, 1
      %p190 = scmp.ne.s32.totalorder %s185, %s187
      %p191 = scmp.eq.s32.totalorder %s25, 0
      %p192 = por %p190, %p191
      %p193 = scmp.ne.s32.totalorder %s185, %s187
      %p194 = scmp.eq.s32.totalorder %s30, 1
      %p195 = por %p193, %p194
      %p196 = scmp.ne.s32.totalorder %s187, %s188
      %p197 = scmp.eq.s32.totalorder %s30, 0
      %p198 = por %p196, %p197
      %p199 = scmp.ne.s32.totalorder %s187, %s188
      %p200 = scmp.eq.s32.totalorder %s31, 1
      %p201 = por %p199, %p200
      %p203 = scmp.ne.s32.totalorder %s188, %s202
      %p204 = scmp.eq.s32.totalorder %s31, 0
      %p205 = por %p203, %p204
      %s207 = sadd.s32 %s206, 1
      %p210 = scmp.eq.s32.totalorder %s25, 1
      %p211 = scmp.ne.s32.totalorder %s206, %s208
      %p212 = scmp.eq.s32.totalorder %s25, 0
      %p213 = por %p211, %p212
      %p214 = scmp.ne.s32.totalorder %s206, %s208
      %p215 = scmp.eq.s32.totalorder %s30, 1
      %p216 = por %p214, %p215
      %p217 = scmp.ne.s32.totalorder %s208, %s209
      %p218 = scmp.eq.s32.totalorder %s30, 0
      %p219 = por %p217, %p218
      %p220 = scmp.ne.s32.totalorder %s208, %s209
      %p221 = scmp.eq.s32.totalorder %s31, 1
      %p222 = por %p220, %p221
      %p224 = scmp.ne.s32.totalorder %s209, %s223
      %p225 = scmp.eq.s32.totalorder %s31, 0
      %p226 = por %p224, %p225
      %s227 = ssub.s32 %s25, %s32
      %p228 = scmp.eq.s32.totalorder %s227, 0
      %s230 = sadd.s32 %s229, 1
      %s231 = scalar_select %p228, %s229, %s230
      %p234 = pneg %p228
      %p235 = scmp.eq.s32.totalorder %s25, 1
      %p236 = por %p234, %p235
      %p237 = scmp.ne.s32.totalorder %s229, %s232
      %p238 = scmp.eq.s32.totalorder %s25, 0
      %p239 = por %p237, %p238
      %p240 = scmp.ne.s32.totalorder %s229, %s232
      %p241 = scmp.eq.s32.totalorder %s30, 1
      %p242 = por %p240, %p241
      %p243 = scmp.ne.s32.totalorder %s232, %s233
      %p244 = scmp.eq.s32.totalorder %s30, 0
      %p245 = por %p243, %p244
      %p246 = scmp.ne.s32.totalorder %s232, %s233
      %p247 = scmp.eq.s32.totalorder %s31, 1
      %p248 = por %p246, %p247
      %p250 = scmp.ne.s32.totalorder %s233, %s249
      %p251 = scmp.eq.s32.totalorder %s31, 0
      %p252 = por %p250, %p251
      %s253 = ssub.s32 %s25, %s32
      %p254 = scmp.eq.s32.totalorder %s253, 0
      %s256 = sadd.s32 %s255, 1
      %s257 = scalar_select %p254, %s255, %s256
      %p260 = pneg %p254
      %p261 = scmp.eq.s32.totalorder %s25, 1
      %p262 = por %p260, %p261
      %p263 = scmp.ne.s32.totalorder %s255, %s258
      %p264 = scmp.eq.s32.totalorder %s25, 0
      %p265 = por %p263, %p264
      %p266 = scmp.ne.s32.totalorder %s255, %s258
      %p267 = scmp.eq.s32.totalorder %s30, 1
      %p268 = por %p266, %p267
      %p269 = scmp.ne.s32.totalorder %s258, %s259
      %p270 = scmp.eq.s32.totalorder %s30, 0
      %p271 = por %p269, %p270
      %p272 = scmp.ne.s32.totalorder %s258, %s259
      %p273 = scmp.eq.s32.totalorder %s31, 1
      %p274 = por %p272, %p273
      %p276 = scmp.ne.s32.totalorder %s259, %s275
      %p277 = scmp.eq.s32.totalorder %s31, 0
      %p278 = por %p276, %p277
      %p279 = scmp.le.s32.totalorder 1, %s25
      %p280 = scmp.lt.s32.totalorder %s25, 3
      %p281 = pnand %p279, %p280
      %p282 = pneg %p281
      // Predicated region
      $region9: #{autoencoder_forward.1} parent=5 // pred_check
        _
      $region10: #{autoencoder_forward.1} parent=5 // pred_check_branch
        %284 = sbr.rel (%p281) target = $region12
      $region11: #{autoencoder_forward.1} parent=5 // pred_region
        %s285 = ssub.s32 %s25, 1
        // Predicated region
        $region13: #{autoencoder_forward.1} parent=11 // pred_check
          %p286 = pneg %p72
        $region14: #{autoencoder_forward.1} parent=11 // pred_check_branch
          %288 = sbr.rel (%p286) target = $region16
        $region15: #{autoencoder_forward.1} parent=11 // pred_region
          _
        $region16: #{autoencoder_forward.1} parent=11 // pred_fallthru
          _
        // Predicated region
        $region17: #{autoencoder_forward.1} parent=11 // pred_check
          %p289 = pneg %p93
        $region18: #{autoencoder_forward.1} parent=11 // pred_check_branch
          %291 = sbr.rel (%p289) target = $region20
        $region19: #{autoencoder_forward.1} parent=11 // pred_region
          _
        $region20: #{autoencoder_forward.1} parent=11 // pred_fallthru
          _
        // Predicated region
        $region21: #{autoencoder_forward.1} parent=11 // pred_check
          %p292 = pneg %p114
        $region22: #{autoencoder_forward.1} parent=11 // pred_check_branch
          %294 = sbr.rel (%p292) target = $region24
        $region23: #{autoencoder_forward.1} parent=11 // pred_region
          _
        $region24: #{autoencoder_forward.1} parent=11 // pred_fallthru
          _
        // Predicated region
        $region25: #{autoencoder_forward.1} parent=11 // pred_check
          %p295 = pneg %p135
        $region26: #{autoencoder_forward.1} parent=11 // pred_check_branch
          %297 = sbr.rel (%p295) target = $region28
        $region27: #{autoencoder_forward.1} parent=11 // pred_region
          _
        $region28: #{autoencoder_forward.1} parent=11 // pred_fallthru
          _
        // Predicated region
        $region29: #{autoencoder_forward.1} parent=11 // pred_check
          %p298 = pneg %p156
        $region30: #{autoencoder_forward.1} parent=11 // pred_check_branch
          %300 = sbr.rel (%p298) target = $region32
        $region31: #{autoencoder_forward.1} parent=11 // pred_region
          _
        $region32: #{autoencoder_forward.1} parent=11 // pred_fallthru
          _
        // Predicated region
        $region33: #{autoencoder_forward.1} parent=11 // pred_check
          %p301 = pneg %p177
        $region34: #{autoencoder_forward.1} parent=11 // pred_check_branch
          %303 = sbr.rel (%p301) target = $region36
        $region35: #{autoencoder_forward.1} parent=11 // pred_region
          _
        $region36: #{autoencoder_forward.1} parent=11 // pred_fallthru
          _
        // Predicated region
        $region37: #{autoencoder_forward.1} parent=11 // pred_check
          %p304 = pneg %p198
        $region38: #{autoencoder_forward.1} parent=11 // pred_check_branch
          %306 = sbr.rel (%p304) target = $region40
        $region39: #{autoencoder_forward.1} parent=11 // pred_region
          _
        $region40: #{autoencoder_forward.1} parent=11 // pred_fallthru
          _
        // Predicated region
        $region41: #{autoencoder_forward.1} parent=11 // pred_check
          %p307 = pneg %p219
        $region42: #{autoencoder_forward.1} parent=11 // pred_check_branch
          %309 = sbr.rel (%p307) target = $region44
        $region43: #{autoencoder_forward.1} parent=11 // pred_region
          _
        $region44: #{autoencoder_forward.1} parent=11 // pred_fallthru
          _
      $region12: #{autoencoder_forward.1} parent=5 // pred_fallthru
        _
      %p310 = scmp.lt.s32.totalorder %s25, 2
      // Predicated region
      $region45: #{autoencoder_forward.1} parent=5 // pred_check
        %p311 = pneg %p310
      $region46: #{autoencoder_forward.1} parent=5 // pred_check_branch
        %313 = sbr.rel (%p311) target = $region48
      $region47: #{autoencoder_forward.1} parent=5 // pred_region
        // Predicated region
        $region49: #{autoencoder_forward.1} parent=47 // pred_check
          %p314 = pneg %p45
        $region50: #{autoencoder_forward.1} parent=47 // pred_check_branch
          %316 = sbr.rel (%p314) target = $region52
        $region51: #{autoencoder_forward.1} parent=47 // pred_region
          %s317 = sand.u32 %s35, 1
          %s318 = scalar_lea.sflag [#allocation4], %s317
          %s319 = sand.u32 %s35, 1
          %s320 = smul.addr %s319, 128
          %s321 = scalar_lea.vmem [#allocation3], %s320
          %s322 = smul.u32 16, %s25
          %s323 = ssub.s32 25, %s322
          %p324 = scmp.lt.s32.totalorder %s323, 16
          %s325 = scalar_select %p324, %s323, 16
          %s326 = smul.u32 128, %s325
          %s328 = ssub.s32 2048, %s326
          %329 = vsyncadd %s318, %s328
          %p330 = scmp.ne.s32.totalorder 0, %s326
          %s331 = smul.addr %s322, 128
          %s332 = scalar_lea.hbm %s0, %s331
          %s333 = smul.u32 8, %s325
          %s334 = sshll.u32 %s321, 4
          %s335 = int_to_ptr.vmem [resolvable:$true] %s334
          %s336 = sshll.u32 %s333, 4
          %340 = dma.hbm_to_vmem [thread:$0]  (%p330), %s332, %s336, %s335, %s318, 128, 128, 8
        $region52: #{autoencoder_forward.1} parent=47 // pred_fallthru
          _
      $region48: #{autoencoder_forward.1} parent=5 // pred_fallthru
        _
      %p341 = scmp.le.s32.totalorder 1, %s25
      %p342 = scmp.lt.s32.totalorder %s25, 3
      %p343 = pnand %p341, %p342
      %p344 = pneg %p343
      // Predicated region
      $region53: #{autoencoder_forward.1} parent=5 // pred_check
        _
      $region54: #{autoencoder_forward.1} parent=5 // pred_check_branch
        %346 = sbr.rel (%p343) target = $region56
      $region55: #{autoencoder_forward.1} parent=5 // pred_region
        %s347 = ssub.s32 %s25, 1
        %s348 = sand.u32 %s38, 1
        %s349 = scalar_lea.sflag [#allocation4], %s348
        %s350 = sand.u32 %s38, 1
        %s351 = smul.addr %s350, 128
        %s352 = scalar_lea.vmem [#allocation3], %s351
        // Predicated region
        $region57: #{autoencoder_forward.1} parent=55 // pred_check
          %p353 = pneg %p51
        $region58: #{autoencoder_forward.1} parent=55 // pred_check_branch
          %355 = sbr.rel (%p353) target = $region60
        $region59: #{autoencoder_forward.1} parent=55 // pred_region
          %356 = dma.done %s349, 2048
        $region60: #{autoencoder_forward.1} parent=55 // pred_fallthru
          _
        %s357 = sand.u32 %s38, 1
        %s358 = scalar_lea.sflag [#allocation4], %s357
        %s359 = sand.u32 %s38, 1
        %s360 = smul.addr %s359, 128
        %s361 = scalar_lea.vmem [#allocation3], %s360
        %p362 = pneg %p51
        %p363 = pneg %p48
        %p364 = pneg %p72
        %p365 = pneg %p69
        %p366 = pneg %p93
        %p367 = pneg %p90
        %p368 = pneg %p114
        %p369 = pneg %p111
        %p370 = pneg %p135
        %p371 = pneg %p132
        %p372 = pneg %p156
        %p373 = pneg %p153
        %p374 = pneg %p177
        %p375 = pneg %p174
        %p376 = pneg %p198
        %p377 = pneg %p195
        %p378 = pneg %p219
        %p379 = pneg %p216
        %p380 = pneg %p245
        %p381 = pneg %p242
        %s382 = sand.u32 %s232, 1
        %s383 = sand.u32 %s232, 1
        %s384 = smul.addr %s383, 128
        %s385 = scalar_lea.vmem [#allocation6], %s384
        %p386 = pneg %p271
        %p387 = pneg %p268
        %s388 = sand.u32 %s258, 1
        %s389 = scalar_lea.sflag [#allocation5], %s388
        %s390 = sand.u32 %s258, 1
        %s391 = smul.addr %s390, 128
        %s392 = scalar_lea.vmem [#allocation7], %s391
        %s393 = smul.u32 16, %s30
        %s394 = ssub.s32 25, %s393
        %p395 = scmp.lt.s32.totalorder %s394, 16
        %s396 = scalar_select %p395, %s394, 16
        %s397 = smul.u32 128, %s396
        %s398 = smul.u32 16, %s30
        %s399 = ssub.s32 25, %s398
        %p400 = scmp.lt.s32.totalorder %s399, 16
        %s401 = scalar_select %p400, %s399, 16
        %s402 = smul.u32 128, %s401
        %s403 = smul.u32 16, %s30
        %s404 = ssub.s32 25, %s403
        %p405 = scmp.lt.s32.totalorder %s404, 16
        %s406 = scalar_select %p405, %s404, 16
        %s407 = smul.u32 128, %s406
        %v409 = vld [vmem:[%s352] sm:$0xff]
        %v410 = vld [vmem:[%s352 + $0x8] sm:$0xff]
        %v411 = vld [vmem:[%s352 + $0x10] sm:$0xff]
        %v412 = vld [vmem:[%s352 + $0x18] sm:$0xff]
        %v413 = vld [vmem:[%s352 + $0x20] sm:$0xff]
        %v414 = vld [vmem:[%s352 + $0x28] sm:$0xff]
        %v415 = vld [vmem:[%s352 + $0x30] sm:$0xff]
        %v416 = vld [vmem:[%s352 + $0x38] sm:$0xff]
        %v417 = vld [vmem:[%s352 + $0x40] sm:$0xff]
        %v418 = vld [vmem:[%s352 + $0x48] sm:$0xff]
        %v419 = vld [vmem:[%s352 + $0x50] sm:$0xff]
        %v420 = vld [vmem:[%s352 + $0x58] sm:$0xff]
        %v421 = vld [vmem:[%s352 + $0x60] sm:$0xff]
        %v422 = vld [vmem:[%s352 + $0x68] sm:$0xff]
        %v423 = vld [vmem:[%s352 + $0x70] sm:$0xff]
        %v424 = vld [vmem:[%s352 + $0x78] sm:$0xff]
        %v425 = vpack.c.bf16 %v410, %v409
        %v426 = vpack.c.bf16 %v412, %v411
        %v427 = vpack.c.bf16 %v414, %v413
        %v428 = vpack.c.bf16 %v416, %v415
        %v429 = vpack.c.bf16 %v418, %v417
        %v430 = vpack.c.bf16 %v420, %v419
        %v431 = vpack.c.bf16 %v422, %v421
        %v432 = vpack.c.bf16 %v424, %v423
        %v433 = vld [vmem:[%s1] sm:$0xff]
        %v434 = vld [vmem:[%s1 + $0x8] sm:$0xff]
        %v435 = vld [vmem:[%s1 + $0x10] sm:$0xff]
        %v436 = vld [vmem:[%s1 + $0x18] sm:$0xff]
        %v437 = vld [vmem:[%s1 + $0x20] sm:$0xff]
        %v438 = vld [vmem:[%s1 + $0x28] sm:$0xff]
        %v439 = vld [vmem:[%s1 + $0x30] sm:$0xff]
        %v440 = vld [vmem:[%s1 + $0x38] sm:$0xff]
        %v441 = vld [vmem:[%s1 + $0x40] sm:$0xff]
        %v442 = vld [vmem:[%s1 + $0x48] sm:$0xff]
        %v443 = vld [vmem:[%s1 + $0x50] sm:$0xff]
        %v444 = vld [vmem:[%s1 + $0x58] sm:$0xff]
        %v445 = vld [vmem:[%s1 + $0x60] sm:$0xff]
        %v446 = vld [vmem:[%s1 + $0x68] sm:$0xff]
        %v447 = vld [vmem:[%s1 + $0x70] sm:$0xff]
        %v448 = vld [vmem:[%s1 + $0x78] sm:$0xff]
        %v449 = vpack.c.bf16 %v434, %v433
        %v450 = vpack.c.bf16 %v436, %v435
        %v451 = vpack.c.bf16 %v438, %v437
        %v452 = vpack.c.bf16 %v440, %v439
        %v453 = vpack.c.bf16 %v442, %v441
        %v454 = vpack.c.bf16 %v444, %v443
        %v455 = vpack.c.bf16 %v446, %v445
        %v456 = vpack.c.bf16 %v448, %v447
        %v457 = vld [vmem:[%s2] sm:$0x1]
        %v459 = vlaneseq
        %v460 = vshrl.u32 %v459, 7
        %v461 = vsub.s32 0, %v460
        %v462 = vrot.slane %v457, %v461
        %464 = vmatprep.subr.bf16.mxu0 0
        %465 = vmatpush1.bf16.msra.mxu0 %v449
        %466 = vmatprep.subr.bf16.mxu0 0
        %467 = vmatpush1.bf16.msra.mxu0 %v450
        %468 = vmatprep.subr.bf16.mxu0 0
        %469 = vmatpush1.bf16.msra.mxu0 %v451
        %470 = vmatprep.subr.bf16.mxu0 0
        %471 = vmatpush1.bf16.msra.mxu0 %v452
        %472 = vmatprep.subr.bf16.mxu0 0
        %473 = vmatpush1.bf16.msra.mxu0 %v453
        %474 = vmatprep.subr.bf16.mxu0 0
        %475 = vmatpush1.bf16.msra.mxu0 %v454
        %476 = vmatprep.subr.bf16.mxu0 0
        %477 = vmatpush1.bf16.msra.mxu0 %v455
        %478 = vmatprep.subr.bf16.mxu0 0
        %479 = vmatpush1.bf16.msra.mxu0 %v456
        %480 = vmatprep.subr.bf16.mxu0 0
        %481 = vmatpush1.bf16.msra.mxu0 0
        %482 = vmatprep.subr.bf16.mxu0 0
        %483 = vmatpush1.bf16.msra.mxu0 0
        %484 = vmatprep.subr.bf16.mxu0 0
        %485 = vmatpush1.bf16.msra.mxu0 0
        %486 = vmatprep.subr.bf16.mxu0 0
        %487 = vmatpush1.bf16.msra.mxu0 0
        %488 = vmatprep.subr.bf16.mxu0 0
        %489 = vmatpush1.bf16.msra.mxu0 0
        %490 = vmatprep.subr.bf16.mxu0 0
        %491 = vmatpush1.bf16.msra.mxu0 0
        %492 = vmatprep.subr.bf16.mxu0 0
        %493 = vmatpush1.bf16.msra.mxu0 0
        %494 = vmatprep.subr.bf16.mxu0 0
        %495 = vmatpush1.bf16.msra.mxu0 0
        %496 = vmatprep.mubr.bf16.mxu0 0
        %497 = vmatmul.mubr.bf16.gmra.mrb[0].mxu0 %v425
        %v498 = vpop.f32.mrb[0].mxu0
        %v499 = vadd.f32 %v462, %v498
        %v500 = vpop.f32.mrb[0].mxu0
        %v501 = vpop.f32.mrb[0].mxu0
        %v502 = vadd.f32 %v462, %v501
        %v503 = vpop.f32.mrb[0].mxu0
        %504 = vmatprep.mubr.bf16.mxu0 0
        %505 = vmatmul.mubr.bf16.gmra.mrb[0].mxu0 %v426
        %v506 = vpop.f32.mrb[0].mxu0
        %v507 = vadd.f32 %v462, %v506
        %v508 = vpop.f32.mrb[0].mxu0
        %v509 = vpop.f32.mrb[0].mxu0
        %v510 = vadd.f32 %v462, %v509
        %v511 = vpop.f32.mrb[0].mxu0
        %512 = vmatprep.mubr.bf16.mxu0 0
        %513 = vmatmul.mubr.bf16.gmra.mrb[0].mxu0 %v427
        %v514 = vpop.f32.mrb[0].mxu0
        %v515 = vadd.f32 %v462, %v514
        %v516 = vpop.f32.mrb[0].mxu0
        %v517 = vpop.f32.mrb[0].mxu0
        %v518 = vadd.f32 %v462, %v517
        %v519 = vpop.f32.mrb[0].mxu0
        %520 = vmatprep.mubr.bf16.mxu0 0
        %521 = vmatmul.mubr.bf16.gmra.mrb[0].mxu0 %v428
        %v522 = vpop.f32.mrb[0].mxu0
        %v523 = vadd.f32 %v462, %v522
        %v524 = vpop.f32.mrb[0].mxu0
        %v525 = vpop.f32.mrb[0].mxu0
        %v526 = vadd.f32 %v462, %v525
        %v527 = vpop.f32.mrb[0].mxu0
        %528 = vmatprep.mubr.bf16.mxu0 0
        %529 = vmatmul.mubr.bf16.gmra.mrb[0].mxu0 %v429
        %v530 = vpop.f32.mrb[0].mxu0
        %v531 = vadd.f32 %v462, %v530
        %v532 = vpop.f32.mrb[0].mxu0
        %v533 = vpop.f32.mrb[0].mxu0
        %v534 = vadd.f32 %v462, %v533
        %v535 = vpop.f32.mrb[0].mxu0
        %536 = vmatprep.mubr.bf16.mxu0 0
        %537 = vmatmul.mubr.bf16.gmra.mrb[0].mxu0 %v430
        %v538 = vpop.f32.mrb[0].mxu0
        %v539 = vadd.f32 %v462, %v538
        %v540 = vpop.f32.mrb[0].mxu0
        %v541 = vpop.f32.mrb[0].mxu0
        %v542 = vadd.f32 %v462, %v541
        %v543 = vpop.f32.mrb[0].mxu0
        %544 = vmatprep.mubr.bf16.mxu0 0
        %545 = vmatmul.mubr.bf16.gmra.mrb[0].mxu0 %v431
        %v546 = vpop.f32.mrb[0].mxu0
        %v547 = vadd.f32 %v462, %v546
        %v548 = vpop.f32.mrb[0].mxu0
        %v549 = vpop.f32.mrb[0].mxu0
        %v550 = vadd.f32 %v462, %v549
        %v551 = vpop.f32.mrb[0].mxu0
        %552 = vmatprep.mubr.bf16.mxu0 0
        %553 = vmatmul.mubr.bf16.gmra.mrb[0].mxu0 %v432
        %v554 = vpop.f32.mrb[0].mxu0
        %v555 = vadd.f32 %v462, %v554
        %v556 = vpop.f32.mrb[0].mxu0
        %v557 = vpop.f32.mrb[0].mxu0
        %v558 = vadd.f32 %v462, %v557
        %v559 = vpop.f32.mrb[0].mxu0
        %560 = vdwg.mxu0
        %v561 = vmax.f32 %v499, 0.0
        %v562 = vmax.f32 %v502, 0.0
        %v563 = vmax.f32 %v507, 0.0
        %v564 = vmax.f32 %v510, 0.0
        %v565 = vmax.f32 %v515, 0.0
        %v566 = vmax.f32 %v518, 0.0
        %v567 = vmax.f32 %v523, 0.0
        %v568 = vmax.f32 %v526, 0.0
        %v569 = vmax.f32 %v531, 0.0
        %v570 = vmax.f32 %v534, 0.0
        %v571 = vmax.f32 %v539, 0.0
        %v572 = vmax.f32 %v542, 0.0
        %v573 = vmax.f32 %v547, 0.0
        %v574 = vmax.f32 %v550, 0.0
        %v575 = vmax.f32 %v555, 0.0
        %v576 = vmax.f32 %v558, 0.0
        %v577 = vld [vmem:[%s3] sm:$0x1]
        %v578 = vlaneseq
        %v579 = vshrl.u32 %v578, 7
        %v580 = vsub.s32 0, %v579
        %v581 = vrot.slane %v577, %v580
        %v582 = vmul.f32 %v561, %v581
        %v583 = vmul.f32 %v562, %v581
        %v584 = vmul.f32 %v563, %v581
        %v585 = vmul.f32 %v564, %v581
        %v586 = vmul.f32 %v565, %v581
        %v587 = vmul.f32 %v566, %v581
        %v588 = vmul.f32 %v567, %v581
        %v589 = vmul.f32 %v568, %v581
        %v590 = vmul.f32 %v569, %v581
        %v591 = vmul.f32 %v570, %v581
        %v592 = vmul.f32 %v571, %v581
        %v593 = vmul.f32 %v572, %v581
        %v594 = vmul.f32 %v573, %v581
        %v595 = vmul.f32 %v574, %v581
        %v596 = vmul.f32 %v575, %v581
        %v597 = vmul.f32 %v576, %v581
        %v598 = vld [vmem:[%s3 + $0x1] sm:$0x1]
        %v599 = vlaneseq
        %v600 = vshrl.u32 %v599, 7
        %v601 = vsub.s32 0, %v600
        %v602 = vrot.slane %v598, %v601
        %604 = vrot.lane.b32.xlu0 %v602, 1
        %v605 = vpop.permute.xlu0 %604
        %v607 = vmul.f32 %v561, %v605
        %v608 = vmul.f32 %v562, %v605
        %v609 = vmul.f32 %v563, %v605
        %v610 = vmul.f32 %v564, %v605
        %v611 = vmul.f32 %v565, %v605
        %v612 = vmul.f32 %v566, %v605
        %v613 = vmul.f32 %v567, %v605
        %v614 = vmul.f32 %v568, %v605
        %v615 = vmul.f32 %v569, %v605
        %v616 = vmul.f32 %v570, %v605
        %v617 = vmul.f32 %v571, %v605
        %v618 = vmul.f32 %v572, %v605
        %v619 = vmul.f32 %v573, %v605
        %v620 = vmul.f32 %v574, %v605
        %v621 = vmul.f32 %v575, %v605
        %v622 = vmul.f32 %v576, %v605
        %639 = vrot.lane.b32.xlu0 %v607, 127
        %v640 = vpop.permute.xlu0 %639
        %641 = vrot.lane.b32.xlu0 %v608, 127
        %v642 = vpop.permute.xlu0 %641
        %643 = vrot.lane.b32.xlu0 %v609, 127
        %v644 = vpop.permute.xlu0 %643
        %645 = vrot.lane.b32.xlu0 %v610, 127
        %v646 = vpop.permute.xlu0 %645
        %647 = vrot.lane.b32.xlu0 %v611, 127
        %v648 = vpop.permute.xlu0 %647
        %649 = vrot.lane.b32.xlu0 %v612, 127
        %v650 = vpop.permute.xlu0 %649
        %651 = vrot.lane.b32.xlu0 %v613, 127
        %v652 = vpop.permute.xlu0 %651
        %653 = vrot.lane.b32.xlu0 %v614, 127
        %v654 = vpop.permute.xlu0 %653
        %655 = vrot.lane.b32.xlu0 %v615, 127
        %v656 = vpop.permute.xlu0 %655
        %657 = vrot.lane.b32.xlu0 %v616, 127
        %v658 = vpop.permute.xlu0 %657
        %659 = vrot.lane.b32.xlu0 %v617, 127
        %v660 = vpop.permute.xlu0 %659
        %661 = vrot.lane.b32.xlu0 %v618, 127
        %v662 = vpop.permute.xlu0 %661
        %663 = vrot.lane.b32.xlu0 %v619, 127
        %v664 = vpop.permute.xlu0 %663
        %665 = vrot.lane.b32.xlu0 %v620, 127
        %v666 = vpop.permute.xlu0 %665
        %667 = vrot.lane.b32.xlu0 %v621, 127
        %v668 = vpop.permute.xlu0 %667
        %669 = vrot.lane.b32.xlu0 %v622, 127
        %v670 = vpop.permute.xlu0 %669
        %v687 = vadd.f32 %v582, %v640
        %v688 = vadd.f32 %v583, %v642
        %v689 = vadd.f32 %v584, %v644
        %v690 = vadd.f32 %v585, %v646
        %v691 = vadd.f32 %v586, %v648
        %v692 = vadd.f32 %v587, %v650
        %v693 = vadd.f32 %v588, %v652
        %v694 = vadd.f32 %v589, %v654
        %v695 = vadd.f32 %v590, %v656
        %v696 = vadd.f32 %v591, %v658
        %v697 = vadd.f32 %v592, %v660
        %v698 = vadd.f32 %v593, %v662
        %v699 = vadd.f32 %v594, %v664
        %v700 = vadd.f32 %v595, %v666
        %v701 = vadd.f32 %v596, %v668
        %v702 = vadd.f32 %v597, %v670
        %v703 = vld [vmem:[#allocation2] sm:$0x1]
        %v705 = vlaneseq
        %v706 = vshrl.u32 %v705, 7
        %v707 = vsub.s32 0, %v706
        %v708 = vrot.slane %v703, %v707
        %v710 = vadd.f32 %v687, %v708
        %v711 = vadd.f32 %v688, %v708
        %v712 = vadd.f32 %v689, %v708
        %v713 = vadd.f32 %v690, %v708
        %v714 = vadd.f32 %v691, %v708
        %v715 = vadd.f32 %v692, %v708
        %v716 = vadd.f32 %v693, %v708
        %v717 = vadd.f32 %v694, %v708
        %v718 = vadd.f32 %v695, %v708
        %v719 = vadd.f32 %v696, %v708
        %v720 = vadd.f32 %v697, %v708
        %v721 = vadd.f32 %v698, %v708
        %v722 = vadd.f32 %v699, %v708
        %v723 = vadd.f32 %v700, %v708
        %v724 = vadd.f32 %v701, %v708
        %v725 = vadd.f32 %v702, %v708
        %v726 = vmax.f32 %v710, 0.0
        %v727 = vmax.f32 %v711, 0.0
        %v728 = vmax.f32 %v712, 0.0
        %v729 = vmax.f32 %v713, 0.0
        %v730 = vmax.f32 %v714, 0.0
        %v731 = vmax.f32 %v715, 0.0
        %v732 = vmax.f32 %v716, 0.0
        %v733 = vmax.f32 %v717, 0.0
        %v734 = vmax.f32 %v718, 0.0
        %v735 = vmax.f32 %v719, 0.0
        %v736 = vmax.f32 %v720, 0.0
        %v737 = vmax.f32 %v721, 0.0
        %v738 = vmax.f32 %v722, 0.0
        %v739 = vmax.f32 %v723, 0.0
        %v740 = vmax.f32 %v724, 0.0
        %v741 = vmax.f32 %v725, 0.0
        %v742 = vld [vmem:[%s5] sm:$0x1]
        %744 = vset.pattern.permute.xlu0 0
        %745 = vperm.xlu0 %744, %v726
        %v746 = vpop.permute.xlu0 %745
        %749 = vset.pattern.permute.xlu0 0
        %750 = vperm.xlu0 %749, %v727
        %v751 = vpop.permute.xlu0 %750
        %754 = vset.pattern.permute.xlu0 0
        %755 = vperm.xlu0 %754, %v728
        %v756 = vpop.permute.xlu0 %755
        %759 = vset.pattern.permute.xlu0 0
        %760 = vperm.xlu0 %759, %v729
        %v761 = vpop.permute.xlu0 %760
        %764 = vset.pattern.permute.xlu0 0
        %765 = vperm.xlu0 %764, %v730
        %v766 = vpop.permute.xlu0 %765
        %769 = vset.pattern.permute.xlu0 0
        %770 = vperm.xlu0 %769, %v731
        %v771 = vpop.permute.xlu0 %770
        %774 = vset.pattern.permute.xlu0 0
        %775 = vperm.xlu0 %774, %v732
        %v776 = vpop.permute.xlu0 %775
        %779 = vset.pattern.permute.xlu0 0
        %780 = vperm.xlu0 %779, %v733
        %v781 = vpop.permute.xlu0 %780
        %784 = vset.pattern.permute.xlu0 0
        %785 = vperm.xlu0 %784, %v734
        %v786 = vpop.permute.xlu0 %785
        %789 = vset.pattern.permute.xlu0 0
        %790 = vperm.xlu0 %789, %v735
        %v791 = vpop.permute.xlu0 %790
        %794 = vset.pattern.permute.xlu0 0
        %795 = vperm.xlu0 %794, %v736
        %v796 = vpop.permute.xlu0 %795
        %799 = vset.pattern.permute.xlu0 0
        %800 = vperm.xlu0 %799, %v737
        %v801 = vpop.permute.xlu0 %800
        %804 = vset.pattern.permute.xlu0 0
        %805 = vperm.xlu0 %804, %v738
        %v806 = vpop.permute.xlu0 %805
        %809 = vset.pattern.permute.xlu0 0
        %810 = vperm.xlu0 %809, %v739
        %v811 = vpop.permute.xlu0 %810
        %814 = vset.pattern.permute.xlu0 0
        %815 = vperm.xlu0 %814, %v740
        %v816 = vpop.permute.xlu0 %815
        %819 = vset.pattern.permute.xlu0 0
        %820 = vperm.xlu0 %819, %v741
        %v821 = vpop.permute.xlu0 %820
        %v824 = vlaneseq
        %v825 = vshrl.u32 %v824, 7
        %v826 = vsub.s32 0, %v825
        %v827 = vrot.slane %v742, %v826
        %v829 = vmul.f32 %v746, %v827
        %v830 = vmul.f32 %v751, %v827
        %v831 = vmul.f32 %v756, %v827
        %v832 = vmul.f32 %v761, %v827
        %v833 = vmul.f32 %v766, %v827
        %v834 = vmul.f32 %v771, %v827
        %v835 = vmul.f32 %v776, %v827
        %v836 = vmul.f32 %v781, %v827
        %v837 = vmul.f32 %v786, %v827
        %v838 = vmul.f32 %v791, %v827
        %v839 = vmul.f32 %v796, %v827
        %v840 = vmul.f32 %v801, %v827
        %v841 = vmul.f32 %v806, %v827
        %v842 = vmul.f32 %v811, %v827
        %v843 = vmul.f32 %v816, %v827
        %v844 = vmul.f32 %v821, %v827
        %v845 = vld [vmem:[%s6] sm:$0x1]
        %v847 = vlaneseq
        %v848 = vshrl.u32 %v847, 7
        %v849 = vsub.s32 0, %v848
        %v850 = vrot.slane %v845, %v849
        %v852 = vadd.f32 %v829, %v850
        %v853 = vadd.f32 %v830, %v850
        %v854 = vadd.f32 %v831, %v850
        %v855 = vadd.f32 %v832, %v850
        %v856 = vadd.f32 %v833, %v850
        %v857 = vadd.f32 %v834, %v850
        %v858 = vadd.f32 %v835, %v850
        %v859 = vadd.f32 %v836, %v850
        %v860 = vadd.f32 %v837, %v850
        %v861 = vadd.f32 %v838, %v850
        %v862 = vadd.f32 %v839, %v850
        %v863 = vadd.f32 %v840, %v850
        %v864 = vadd.f32 %v841, %v850
        %v865 = vadd.f32 %v842, %v850
        %v866 = vadd.f32 %v843, %v850
        %v867 = vadd.f32 %v844, %v850
        %v868 = vmax.f32 %v852, 0.0
        %v869 = vmax.f32 %v853, 0.0
        %v870 = vmax.f32 %v854, 0.0
        %v871 = vmax.f32 %v855, 0.0
        %v872 = vmax.f32 %v856, 0.0
        %v873 = vmax.f32 %v857, 0.0
        %v874 = vmax.f32 %v858, 0.0
        %v875 = vmax.f32 %v859, 0.0
        %v876 = vmax.f32 %v860, 0.0
        %v877 = vmax.f32 %v861, 0.0
        %v878 = vmax.f32 %v862, 0.0
        %v879 = vmax.f32 %v863, 0.0
        %v880 = vmax.f32 %v864, 0.0
        %v881 = vmax.f32 %v865, 0.0
        %v882 = vmax.f32 %v866, 0.0
        %v883 = vmax.f32 %v867, 0.0
        %v884 = vld [vmem:[%s7] sm:$0x1]
        %886 = vset.pattern.permute.xlu0 0
        %887 = vperm.xlu0 %886, %v868
        %v888 = vpop.permute.xlu0 %887
        %891 = vset.pattern.permute.xlu0 0
        %892 = vperm.xlu0 %891, %v869
        %v893 = vpop.permute.xlu0 %892
        %896 = vset.pattern.permute.xlu0 0
        %897 = vperm.xlu0 %896, %v870
        %v898 = vpop.permute.xlu0 %897
        %901 = vset.pattern.permute.xlu0 0
        %902 = vperm.xlu0 %901, %v871
        %v903 = vpop.permute.xlu0 %902
        %906 = vset.pattern.permute.xlu0 0
        %907 = vperm.xlu0 %906, %v872
        %v908 = vpop.permute.xlu0 %907
        %911 = vset.pattern.permute.xlu0 0
        %912 = vperm.xlu0 %911, %v873
        %v913 = vpop.permute.xlu0 %912
        %916 = vset.pattern.permute.xlu0 0
        %917 = vperm.xlu0 %916, %v874
        %v918 = vpop.permute.xlu0 %917
        %921 = vset.pattern.permute.xlu0 0
        %922 = vperm.xlu0 %921, %v875
        %v923 = vpop.permute.xlu0 %922
        %926 = vset.pattern.permute.xlu0 0
        %927 = vperm.xlu0 %926, %v876
        %v928 = vpop.permute.xlu0 %927
        %931 = vset.pattern.permute.xlu0 0
        %932 = vperm.xlu0 %931, %v877
        %v933 = vpop.permute.xlu0 %932
        %936 = vset.pattern.permute.xlu0 0
        %937 = vperm.xlu0 %936, %v878
        %v938 = vpop.permute.xlu0 %937
        %941 = vset.pattern.permute.xlu0 0
        %942 = vperm.xlu0 %941, %v879
        %v943 = vpop.permute.xlu0 %942
        %946 = vset.pattern.permute.xlu0 0
        %947 = vperm.xlu0 %946, %v880
        %v948 = vpop.permute.xlu0 %947
        %951 = vset.pattern.permute.xlu0 0
        %952 = vperm.xlu0 %951, %v881
        %v953 = vpop.permute.xlu0 %952
        %956 = vset.pattern.permute.xlu0 0
        %957 = vperm.xlu0 %956, %v882
        %v958 = vpop.permute.xlu0 %957
        %961 = vset.pattern.permute.xlu0 0
        %962 = vperm.xlu0 %961, %v883
        %v963 = vpop.permute.xlu0 %962
        %v965 = vlaneseq
        %v966 = vshrl.u32 %v965, 7
        %v967 = vsub.s32 0, %v966
        %v968 = vrot.slane %v884, %v967
        %v969 = vmul.f32 %v888, %v968
        %v970 = vmul.f32 %v893, %v968
        %v971 = vmul.f32 %v898, %v968
        %v972 = vmul.f32 %v903, %v968
        %v973 = vmul.f32 %v908, %v968
        %v974 = vmul.f32 %v913, %v968
        %v975 = vmul.f32 %v918, %v968
        %v976 = vmul.f32 %v923, %v968
        %v977 = vmul.f32 %v928, %v968
        %v978 = vmul.f32 %v933, %v968
        %v979 = vmul.f32 %v938, %v968
        %v980 = vmul.f32 %v943, %v968
        %v981 = vmul.f32 %v948, %v968
        %v982 = vmul.f32 %v953, %v968
        %v983 = vmul.f32 %v958, %v968
        %v984 = vmul.f32 %v963, %v968
        %v985 = vld [vmem:[%s7 + $0x1] sm:$0x1]
        %986 = vset.pattern.permute.xlu0 1
        %987 = vperm.xlu0 %986, %v868
        %v988 = vpop.permute.xlu0 %987
        %990 = vset.pattern.permute.xlu0 1
        %991 = vperm.xlu0 %990, %v869
        %v992 = vpop.permute.xlu0 %991
        %994 = vset.pattern.permute.xlu0 1
        %995 = vperm.xlu0 %994, %v870
        %v996 = vpop.permute.xlu0 %995
        %998 = vset.pattern.permute.xlu0 1
        %999 = vperm.xlu0 %998, %v871
        %v1000 = vpop.permute.xlu0 %999
        %1002 = vset.pattern.permute.xlu0 1
        %1003 = vperm.xlu0 %1002, %v872
        %v1004 = vpop.permute.xlu0 %1003
        %1006 = vset.pattern.permute.xlu0 1
        %1007 = vperm.xlu0 %1006, %v873
        %v1008 = vpop.permute.xlu0 %1007
        %1010 = vset.pattern.permute.xlu0 1
        %1011 = vperm.xlu0 %1010, %v874
        %v1012 = vpop.permute.xlu0 %1011
        %1014 = vset.pattern.permute.xlu0 1
        %1015 = vperm.xlu0 %1014, %v875
        %v1016 = vpop.permute.xlu0 %1015
        %1018 = vset.pattern.permute.xlu0 1
        %1019 = vperm.xlu0 %1018, %v876
        %v1020 = vpop.permute.xlu0 %1019
        %1022 = vset.pattern.permute.xlu0 1
        %1023 = vperm.xlu0 %1022, %v877
        %v1024 = vpop.permute.xlu0 %1023
        %1026 = vset.pattern.permute.xlu0 1
        %1027 = vperm.xlu0 %1026, %v878
        %v1028 = vpop.permute.xlu0 %1027
        %1030 = vset.pattern.permute.xlu0 1
        %1031 = vperm.xlu0 %1030, %v879
        %v1032 = vpop.permute.xlu0 %1031
        %1034 = vset.pattern.permute.xlu0 1
        %1035 = vperm.xlu0 %1034, %v880
        %v1036 = vpop.permute.xlu0 %1035
        %1038 = vset.pattern.permute.xlu0 1
        %1039 = vperm.xlu0 %1038, %v881
        %v1040 = vpop.permute.xlu0 %1039
        %1042 = vset.pattern.permute.xlu0 1
        %1043 = vperm.xlu0 %1042, %v882
        %v1044 = vpop.permute.xlu0 %1043
        %1046 = vset.pattern.permute.xlu0 1
        %1047 = vperm.xlu0 %1046, %v883
        %v1048 = vpop.permute.xlu0 %1047
        %v1050 = vlaneseq
        %v1051 = vshrl.u32 %v1050, 7
        %v1052 = vsub.s32 0, %v1051
        %v1053 = vrot.slane %v985, %v1052
        %v1054 = vmul.f32 %v988, %v1053
        %v1055 = vmul.f32 %v992, %v1053
        %v1056 = vmul.f32 %v996, %v1053
        %v1057 = vmul.f32 %v1000, %v1053
        %v1058 = vmul.f32 %v1004, %v1053
        %v1059 = vmul.f32 %v1008, %v1053
        %v1060 = vmul.f32 %v1012, %v1053
        %v1061 = vmul.f32 %v1016, %v1053
        %v1062 = vmul.f32 %v1020, %v1053
        %v1063 = vmul.f32 %v1024, %v1053
        %v1064 = vmul.f32 %v1028, %v1053
        %v1065 = vmul.f32 %v1032, %v1053
        %v1066 = vmul.f32 %v1036, %v1053
        %v1067 = vmul.f32 %v1040, %v1053
        %v1068 = vmul.f32 %v1044, %v1053
        %v1069 = vmul.f32 %v1048, %v1053
        %v1070 = vadd.f32 %v969, %v1054
        %v1071 = vadd.f32 %v970, %v1055
        %v1072 = vadd.f32 %v971, %v1056
        %v1073 = vadd.f32 %v972, %v1057
        %v1074 = vadd.f32 %v973, %v1058
        %v1075 = vadd.f32 %v974, %v1059
        %v1076 = vadd.f32 %v975, %v1060
        %v1077 = vadd.f32 %v976, %v1061
        %v1078 = vadd.f32 %v977, %v1062
        %v1079 = vadd.f32 %v978, %v1063
        %v1080 = vadd.f32 %v979, %v1064
        %v1081 = vadd.f32 %v980, %v1065
        %v1082 = vadd.f32 %v981, %v1066
        %v1083 = vadd.f32 %v982, %v1067
        %v1084 = vadd.f32 %v983, %v1068
        %v1085 = vadd.f32 %v984, %v1069
        %v1086 = vld [vmem:[%s8] sm:$0x1]
        %v1088 = vlaneseq
        %v1089 = vshrl.u32 %v1088, 7
        %v1090 = vsub.s32 0, %v1089
        %v1091 = vrot.slane %v1086, %v1090
        %v1093 = vadd.f32 %v1070, %v1091
        %v1094 = vadd.f32 %v1071, %v1091
        %v1095 = vadd.f32 %v1072, %v1091
        %v1096 = vadd.f32 %v1073, %v1091
        %v1097 = vadd.f32 %v1074, %v1091
        %v1098 = vadd.f32 %v1075, %v1091
        %v1099 = vadd.f32 %v1076, %v1091
        %v1100 = vadd.f32 %v1077, %v1091
        %v1101 = vadd.f32 %v1078, %v1091
        %v1102 = vadd.f32 %v1079, %v1091
        %v1103 = vadd.f32 %v1080, %v1091
        %v1104 = vadd.f32 %v1081, %v1091
        %v1105 = vadd.f32 %v1082, %v1091
        %v1106 = vadd.f32 %v1083, %v1091
        %v1107 = vadd.f32 %v1084, %v1091
        %v1108 = vadd.f32 %v1085, %v1091
        %v1109 = vsub.f32 0.0, %v1093
        %v1110 = vsub.f32 0.0, %v1094
        %v1111 = vsub.f32 0.0, %v1095
        %v1112 = vsub.f32 0.0, %v1096
        %v1113 = vsub.f32 0.0, %v1097
        %v1114 = vsub.f32 0.0, %v1098
        %v1115 = vsub.f32 0.0, %v1099
        %v1116 = vsub.f32 0.0, %v1100
        %v1117 = vsub.f32 0.0, %v1101
        %v1118 = vsub.f32 0.0, %v1102
        %v1119 = vsub.f32 0.0, %v1103
        %v1120 = vsub.f32 0.0, %v1104
        %v1121 = vsub.f32 0.0, %v1105
        %v1122 = vsub.f32 0.0, %v1106
        %v1123 = vsub.f32 0.0, %v1107
        %v1124 = vsub.f32 0.0, %v1108
        %v1125 = vmul.f32 %v1109, 1.442695
        %v1126 = vpow.pop %v1125
        %v1127 = vmul.f32 %v1110, 1.442695
        %v1128 = vpow.pop %v1127
        %v1129 = vmul.f32 %v1111, 1.442695
        %v1130 = vpow.pop %v1129
        %v1131 = vmul.f32 %v1112, 1.442695
        %v1132 = vpow.pop %v1131
        %v1133 = vmul.f32 %v1113, 1.442695
        %v1134 = vpow.pop %v1133
        %v1135 = vmul.f32 %v1114, 1.442695
        %v1136 = vpow.pop %v1135
        %v1137 = vmul.f32 %v1115, 1.442695
        %v1138 = vpow.pop %v1137
        %v1139 = vmul.f32 %v1116, 1.442695
        %v1140 = vpow.pop %v1139
        %v1141 = vmul.f32 %v1117, 1.442695
        %v1142 = vpow.pop %v1141
        %v1143 = vmul.f32 %v1118, 1.442695
        %v1144 = vpow.pop %v1143
        %v1145 = vmul.f32 %v1119, 1.442695
        %v1146 = vpow.pop %v1145
        %v1147 = vmul.f32 %v1120, 1.442695
        %v1148 = vpow.pop %v1147
        %v1149 = vmul.f32 %v1121, 1.442695
        %v1150 = vpow.pop %v1149
        %v1151 = vmul.f32 %v1122, 1.442695
        %v1152 = vpow.pop %v1151
        %v1153 = vmul.f32 %v1123, 1.442695
        %v1154 = vpow.pop %v1153
        %v1155 = vmul.f32 %v1124, 1.442695
        %v1156 = vpow.pop %v1155
        %v1157 = vadd.f32 %v1126, 1.0
        %v1158 = vadd.f32 %v1128, 1.0
        %v1159 = vadd.f32 %v1130, 1.0
        %v1160 = vadd.f32 %v1132, 1.0
        %v1161 = vadd.f32 %v1134, 1.0
        %v1162 = vadd.f32 %v1136, 1.0
        %v1163 = vadd.f32 %v1138, 1.0
        %v1164 = vadd.f32 %v1140, 1.0
        %v1165 = vadd.f32 %v1142, 1.0
        %v1166 = vadd.f32 %v1144, 1.0
        %v1167 = vadd.f32 %v1146, 1.0
        %v1168 = vadd.f32 %v1148, 1.0
        %v1169 = vadd.f32 %v1150, 1.0
        %v1170 = vadd.f32 %v1152, 1.0
        %v1171 = vadd.f32 %v1154, 1.0
        %v1172 = vadd.f32 %v1156, 1.0
        %v1173 = vrcp.pop %v1157
        %v1174 = vrcp.pop %v1158
        %v1175 = vrcp.pop %v1159
        %v1176 = vrcp.pop %v1160
        %v1177 = vrcp.pop %v1161
        %v1178 = vrcp.pop %v1162
        %v1179 = vrcp.pop %v1163
        %v1180 = vrcp.pop %v1164
        %v1181 = vrcp.pop %v1165
        %v1182 = vrcp.pop %v1166
        %v1183 = vrcp.pop %v1167
        %v1184 = vrcp.pop %v1168
        %v1185 = vrcp.pop %v1169
        %v1186 = vrcp.pop %v1170
        %v1187 = vrcp.pop %v1171
        %v1188 = vrcp.pop %v1172
        %vm1189 = vcmask 7168
        %1190 = vst.msk [vmem:[%s385] sm:$0xff] %vm1189, %v726
        %1191 = vst.msk [vmem:[%s385 + $0x8] sm:$0xff] %vm1189, %v727
        %1192 = vst.msk [vmem:[%s385 + $0x10] sm:$0xff] %vm1189, %v728
        %1193 = vst.msk [vmem:[%s385 + $0x18] sm:$0xff] %vm1189, %v729
        %1194 = vst.msk [vmem:[%s385 + $0x20] sm:$0xff] %vm1189, %v730
        %1195 = vst.msk [vmem:[%s385 + $0x28] sm:$0xff] %vm1189, %v731
        %1196 = vst.msk [vmem:[%s385 + $0x30] sm:$0xff] %vm1189, %v732
        %1197 = vst.msk [vmem:[%s385 + $0x38] sm:$0xff] %vm1189, %v733
        %1198 = vst.msk [vmem:[%s385 + $0x40] sm:$0xff] %vm1189, %v734
        %1199 = vst.msk [vmem:[%s385 + $0x48] sm:$0xff] %vm1189, %v735
        %1200 = vst.msk [vmem:[%s385 + $0x50] sm:$0xff] %vm1189, %v736
        %1201 = vst.msk [vmem:[%s385 + $0x58] sm:$0xff] %vm1189, %v737
        %1202 = vst.msk [vmem:[%s385 + $0x60] sm:$0xff] %vm1189, %v738
        %1203 = vst.msk [vmem:[%s385 + $0x68] sm:$0xff] %vm1189, %v739
        %1204 = vst.msk [vmem:[%s385 + $0x70] sm:$0xff] %vm1189, %v740
        %1205 = vst.msk [vmem:[%s385 + $0x78] sm:$0xff] %vm1189, %v741
        %1206 = vst [vmem:[%s392] sm:$0xff] %v1173
        %1207 = vst [vmem:[%s392 + $0x8] sm:$0xff] %v1174
        %1208 = vst [vmem:[%s392 + $0x10] sm:$0xff] %v1175
        %1209 = vst [vmem:[%s392 + $0x18] sm:$0xff] %v1176
        %1210 = vst [vmem:[%s392 + $0x20] sm:$0xff] %v1177
        %1211 = vst [vmem:[%s392 + $0x28] sm:$0xff] %v1178
        %1212 = vst [vmem:[%s392 + $0x30] sm:$0xff] %v1179
        %1213 = vst [vmem:[%s392 + $0x38] sm:$0xff] %v1180
        %1214 = vst [vmem:[%s392 + $0x40] sm:$0xff] %v1181
        %1215 = vst [vmem:[%s392 + $0x48] sm:$0xff] %v1182
        %1216 = vst [vmem:[%s392 + $0x50] sm:$0xff] %v1183
        %1217 = vst [vmem:[%s392 + $0x58] sm:$0xff] %v1184
        %1218 = vst [vmem:[%s392 + $0x60] sm:$0xff] %v1185
        %1219 = vst [vmem:[%s392 + $0x68] sm:$0xff] %v1186
        %1220 = vst [vmem:[%s392 + $0x70] sm:$0xff] %v1187
        %1221 = vst [vmem:[%s392 + $0x78] sm:$0xff] %v1188
        %s1222 = sand.u32 %s232, 1
        %s1223 = sand.u32 %s232, 1
        %s1224 = smul.addr %s1223, 128
        %s1225 = scalar_lea.vmem [#allocation6], %s1224
        %s1226 = sand.u32 %s258, 1
        %s1227 = scalar_lea.sflag [#allocation5], %s1226
        %s1228 = sand.u32 %s258, 1
        %s1229 = smul.addr %s1228, 128
        %s1230 = scalar_lea.vmem [#allocation7], %s1229
        // Predicated region
        $region61: #{autoencoder_forward.1} parent=55 // pred_check
          %p1231 = pneg %p242
        $region62: #{autoencoder_forward.1} parent=55 // pred_check_branch
          %1233 = sbr.rel (%p1231) target = $region64
        $region63: #{autoencoder_forward.1} parent=55 // pred_region
          %s1234 = smul.u32 16, %s30
          %s1235 = ssub.s32 25, %s1234
          %p1236 = scmp.lt.s32.totalorder %s1235, 16
          %s1237 = scalar_select %p1236, %s1235, 16
          %s1238 = smul.u32 128, %s1237
          %p1239 = scmp.ne.s32.totalorder 0, %s1238
          %s1240 = smul.addr %s1234, 8
          %s1241 = scalar_lea.vmem %s9, %s1240
          // Predicated region
          $region65: #{autoencoder_forward.1} parent=63 // pred_check
            %p1242 = pneg %p1239
          $region66: #{autoencoder_forward.1} parent=63 // pred_check_branch
            %1244 = sbr.rel (%p1242) target = $region68
          $region67: #{autoencoder_forward.1} parent=63 // pred_region
            // Predicated region
            $region69: #{autoencoder_forward.1} parent=67 // pred_check
              _
            $region70: #{autoencoder_forward.1} parent=67 // pred_check_branch
              %1246 = sbr.rel (0) target = $region72
            $region71: #{autoencoder_forward.1} parent=67 // pred_region
              // Predicated region
              $region91: #{autoencoder_forward.1} parent=71 // pred_check
                _
              $region92: #{autoencoder_forward.1} parent=71 // pred_check_branch
                %1325 = sbr.rel (0) target = $region94
              $region93: #{autoencoder_forward.1} parent=71 // pred_region
                %s1326 = sshrl.u32 %s1237, 4
                // While loop
                $region95: #{autoencoder_forward.1} parent=93 // loop_pre_header
                  _
                $region96: #{autoencoder_forward.1} parent=93 // loop_header
                  %s1328 = sphi 0, %s1330
                  %p1329 = scmp.ge.s32.totalorder %s1328, %s1326
                  %s1333 = sphi 0, %s1370
                  %s1334 = sphi %s1225, %s1373
                  %s1335 = sphi %s1241, %s1374
                $region97: #{autoencoder_forward.1} parent=93 // loop_header_branch
                  %1332 = sbr.rel (%p1329) target = $region101
                $region98: #{autoencoder_forward.1} parent=93 // loop_body
                  %v1336 = vld [vmem:[%s1334] sm:$0xff]
                  %1337 = vst [vmem:[%s1335] sm:$0xff] %v1336
                  %v1338 = vld [vmem:[%s1334 + $0x8] sm:$0xff]
                  %1339 = vst [vmem:[%s1335 + $0x8] sm:$0xff] %v1338
                  %v1340 = vld [vmem:[%s1334 + $0x10] sm:$0xff]
                  %1341 = vst [vmem:[%s1335 + $0x10] sm:$0xff] %v1340
                  %v1342 = vld [vmem:[%s1334 + $0x18] sm:$0xff]
                  %1343 = vst [vmem:[%s1335 + $0x18] sm:$0xff] %v1342
                  %v1344 = vld [vmem:[%s1334 + $0x20] sm:$0xff]
                  %1345 = vst [vmem:[%s1335 + $0x20] sm:$0xff] %v1344
                  %v1346 = vld [vmem:[%s1334 + $0x28] sm:$0xff]
                  %1347 = vst [vmem:[%s1335 + $0x28] sm:$0xff] %v1346
                  %v1348 = vld [vmem:[%s1334 + $0x30] sm:$0xff]
                  %1349 = vst [vmem:[%s1335 + $0x30] sm:$0xff] %v1348
                  %v1350 = vld [vmem:[%s1334 + $0x38] sm:$0xff]
                  %1351 = vst [vmem:[%s1335 + $0x38] sm:$0xff] %v1350
                  %v1352 = vld [vmem:[%s1334 + $0x40] sm:$0xff]
                  %1353 = vst [vmem:[%s1335 + $0x40] sm:$0xff] %v1352
                  %v1354 = vld [vmem:[%s1334 + $0x48] sm:$0xff]
                  %1355 = vst [vmem:[%s1335 + $0x48] sm:$0xff] %v1354
                  %v1356 = vld [vmem:[%s1334 + $0x50] sm:$0xff]
                  %1357 = vst [vmem:[%s1335 + $0x50] sm:$0xff] %v1356
                  %v1358 = vld [vmem:[%s1334 + $0x58] sm:$0xff]
                  %1359 = vst [vmem:[%s1335 + $0x58] sm:$0xff] %v1358
                  %v1360 = vld [vmem:[%s1334 + $0x60] sm:$0xff]
                  %1361 = vst [vmem:[%s1335 + $0x60] sm:$0xff] %v1360
                  %v1362 = vld [vmem:[%s1334 + $0x68] sm:$0xff]
                  %1363 = vst [vmem:[%s1335 + $0x68] sm:$0xff] %v1362
                  %v1364 = vld [vmem:[%s1334 + $0x70] sm:$0xff]
                  %1365 = vst [vmem:[%s1335 + $0x70] sm:$0xff] %v1364
                  %v1366 = vld [vmem:[%s1334 + $0x78] sm:$0xff]
                  %1367 = vst [vmem:[%s1335 + $0x78] sm:$0xff] %v1366
                  %s1368 = sadd.s32 1, %s1333
                  %p1369 = scmp.ge.s32.totalorder %s1368, %s1326
                  %s1370 = scalar_select %p1369, 0, %s1368
                  %s1371 = smul.u32 %s1370, 128
                  %s1372 = smul.u32 %s1370, 128
                  %s1373 = scalar_lea.vmem %s1225, %s1371 [#allocation6]
                  %s1374 = scalar_lea.vmem %s1241, %s1372
                $region99: #{autoencoder_forward.1} parent=93 // loop_footer
                  %s1330 = sadd.s32 %s1328, 1
                $region100: #{autoencoder_forward.1} parent=93 // loop_footer_branch
                  %1327 = sbr.rel target = $region96
                $region101: #{autoencoder_forward.1} parent=93 // loop_exit
                  _
                %s1375 = sshrl.u32 %s1237, 4
                %s1376 = sand.u32 %s1237, 15
                %s1377 = smul.u32 %s1375, 16
                %s1378 = smul.u32 8, %s1377
                %s1379 = scalar_lea.vmem %s1225, %s1378 [#allocation6]
                %s1380 = smul.u32 8, %s1377
                %s1381 = scalar_lea.vmem %s1241, %s1380
                // While loop
                $region102: #{autoencoder_forward.1} parent=93 // loop_pre_header
                  _
                $region103: #{autoencoder_forward.1} parent=93 // loop_header
                  %s1383 = sphi 0, %s1385
                  %p1384 = scmp.ge.s32.totalorder %s1383, %s1376
                  %s1388 = sphi 0, %s1395
                  %s1389 = sphi %s1379, %s1398
                  %s1390 = sphi %s1381, %s1399
                $region104: #{autoencoder_forward.1} parent=93 // loop_header_branch
                  %1387 = sbr.rel (%p1384) target = $region108
                $region105: #{autoencoder_forward.1} parent=93 // loop_body
                  %v1391 = vld [vmem:[%s1389] sm:$0xff]
                  %1392 = vst [vmem:[%s1390] sm:$0xff] %v1391
                  %s1393 = sadd.s32 1, %s1388
                  %p1394 = scmp.ge.s32.totalorder %s1393, %s1376
                  %s1395 = scalar_select %p1394, 0, %s1393
                  %s1396 = smul.u32 %s1395, 8
                  %s1397 = smul.u32 %s1395, 8
                  %s1398 = scalar_lea.vmem %s1379, %s1396 [#allocation6]
                  %s1399 = scalar_lea.vmem %s1381, %s1397
                $region106: #{autoencoder_forward.1} parent=93 // loop_footer
                  %s1385 = sadd.s32 %s1383, 1
                $region107: #{autoencoder_forward.1} parent=93 // loop_footer_branch
                  %1382 = sbr.rel target = $region103
                $region108: #{autoencoder_forward.1} parent=93 // loop_exit
                  _
              $region94: #{autoencoder_forward.1} parent=71 // pred_fallthru
                _
              // Predicated region
              $region109: #{autoencoder_forward.1} parent=71 // pred_check
                _
              $region110: #{autoencoder_forward.1} parent=71 // pred_check_branch
                %1401 = sbr.rel target = $region112
              $region111: #{autoencoder_forward.1} parent=71 // pred_region
                _
              $region112: #{autoencoder_forward.1} parent=71 // pred_fallthru
                _
            $region72: #{autoencoder_forward.1} parent=67 // pred_fallthru
              _
            // Predicated region
            $region73: #{autoencoder_forward.1} parent=67 // pred_check
              _
            $region74: #{autoencoder_forward.1} parent=67 // pred_check_branch
              %1248 = sbr.rel target = $region76
            $region75: #{autoencoder_forward.1} parent=67 // pred_region
              %s1250 = sshrl.u32 %s1237, 4
              // While loop
              $region77: #{autoencoder_forward.1} parent=75 // loop_pre_header
                _
              $region78: #{autoencoder_forward.1} parent=75 // loop_header
                %s1252 = sphi 0, %s1254
                %p1253 = scmp.ge.s32.totalorder %s1252, %s1250
                %s1257 = sphi 0, %s1294
                %s1258 = sphi %s1225, %s1297
                %s1259 = sphi %s1241, %s1298
              $region79: #{autoencoder_forward.1} parent=75 // loop_header_branch
                %1256 = sbr.rel (%p1253) target = $region83
              $region80: #{autoencoder_forward.1} parent=75 // loop_body
                %v1260 = vld [vmem:[%s1258] sm:$0xff]
                %1261 = vst [vmem:[%s1259] sm:$0xff] %v1260
                %v1262 = vld [vmem:[%s1258 + $0x8] sm:$0xff]
                %1263 = vst [vmem:[%s1259 + $0x8] sm:$0xff] %v1262
                %v1264 = vld [vmem:[%s1258 + $0x10] sm:$0xff]
                %1265 = vst [vmem:[%s1259 + $0x10] sm:$0xff] %v1264
                %v1266 = vld [vmem:[%s1258 + $0x18] sm:$0xff]
                %1267 = vst [vmem:[%s1259 + $0x18] sm:$0xff] %v1266
                %v1268 = vld [vmem:[%s1258 + $0x20] sm:$0xff]
                %1269 = vst [vmem:[%s1259 + $0x20] sm:$0xff] %v1268
                %v1270 = vld [vmem:[%s1258 + $0x28] sm:$0xff]
                %1271 = vst [vmem:[%s1259 + $0x28] sm:$0xff] %v1270
                %v1272 = vld [vmem:[%s1258 + $0x30] sm:$0xff]
                %1273 = vst [vmem:[%s1259 + $0x30] sm:$0xff] %v1272
                %v1274 = vld [vmem:[%s1258 + $0x38] sm:$0xff]
                %1275 = vst [vmem:[%s1259 + $0x38] sm:$0xff] %v1274
                %v1276 = vld [vmem:[%s1258 + $0x40] sm:$0xff]
                %1277 = vst [vmem:[%s1259 + $0x40] sm:$0xff] %v1276
                %v1278 = vld [vmem:[%s1258 + $0x48] sm:$0xff]
                %1279 = vst [vmem:[%s1259 + $0x48] sm:$0xff] %v1278
                %v1280 = vld [vmem:[%s1258 + $0x50] sm:$0xff]
                %1281 = vst [vmem:[%s1259 + $0x50] sm:$0xff] %v1280
                %v1282 = vld [vmem:[%s1258 + $0x58] sm:$0xff]
                %1283 = vst [vmem:[%s1259 + $0x58] sm:$0xff] %v1282
                %v1284 = vld [vmem:[%s1258 + $0x60] sm:$0xff]
                %1285 = vst [vmem:[%s1259 + $0x60] sm:$0xff] %v1284
                %v1286 = vld [vmem:[%s1258 + $0x68] sm:$0xff]
                %1287 = vst [vmem:[%s1259 + $0x68] sm:$0xff] %v1286
                %v1288 = vld [vmem:[%s1258 + $0x70] sm:$0xff]
                %1289 = vst [vmem:[%s1259 + $0x70] sm:$0xff] %v1288
                %v1290 = vld [vmem:[%s1258 + $0x78] sm:$0xff]
                %1291 = vst [vmem:[%s1259 + $0x78] sm:$0xff] %v1290
                %s1292 = sadd.s32 1, %s1257
                %p1293 = scmp.ge.s32.totalorder %s1292, %s1250
                %s1294 = scalar_select %p1293, 0, %s1292
                %s1295 = smul.u32 %s1294, 128
                %s1296 = smul.u32 %s1294, 128
                %s1297 = scalar_lea.vmem %s1225, %s1295 [#allocation6]
                %s1298 = scalar_lea.vmem %s1241, %s1296
              $region81: #{autoencoder_forward.1} parent=75 // loop_footer
                %s1254 = sadd.s32 %s1252, 1
              $region82: #{autoencoder_forward.1} parent=75 // loop_footer_branch
                %1251 = sbr.rel target = $region78
              $region83: #{autoencoder_forward.1} parent=75 // loop_exit
                _
              %s1299 = sshrl.u32 %s1237, 4
              %s1300 = sand.u32 %s1237, 15
              %s1301 = smul.u32 %s1299, 16
              %s1302 = smul.u32 8, %s1301
              %s1303 = scalar_lea.vmem %s1225, %s1302 [#allocation6]
              %s1304 = smul.u32 8, %s1301
              %s1305 = scalar_lea.vmem %s1241, %s1304
              // While loop
              $region84: #{autoencoder_forward.1} parent=75 // loop_pre_header
                _
              $region85: #{autoencoder_forward.1} parent=75 // loop_header
                %s1307 = sphi 0, %s1309
                %p1308 = scmp.ge.s32.totalorder %s1307, %s1300
                %s1312 = sphi 0, %s1319
                %s1313 = sphi %s1303, %s1322
                %s1314 = sphi %s1305, %s1323
              $region86: #{autoencoder_forward.1} parent=75 // loop_header_branch
                %1311 = sbr.rel (%p1308) target = $region90
              $region87: #{autoencoder_forward.1} parent=75 // loop_body
                %v1315 = vld [vmem:[%s1313] sm:$0xff]
                %1316 = vst [vmem:[%s1314] sm:$0xff] %v1315
                %s1317 = sadd.s32 1, %s1312
                %p1318 = scmp.ge.s32.totalorder %s1317, %s1300
                %s1319 = scalar_select %p1318, 0, %s1317
                %s1320 = smul.u32 %s1319, 8
                %s1321 = smul.u32 %s1319, 8
                %s1322 = scalar_lea.vmem %s1303, %s1320 [#allocation6]
                %s1323 = scalar_lea.vmem %s1305, %s1321
              $region88: #{autoencoder_forward.1} parent=75 // loop_footer
                %s1309 = sadd.s32 %s1307, 1
              $region89: #{autoencoder_forward.1} parent=75 // loop_footer_branch
                %1306 = sbr.rel target = $region85
              $region90: #{autoencoder_forward.1} parent=75 // loop_exit
                _
            $region76: #{autoencoder_forward.1} parent=67 // pred_fallthru
              _
          $region68: #{autoencoder_forward.1} parent=63 // pred_fallthru
            _
          %1402 = vnop
        $region64: #{autoencoder_forward.1} parent=55 // pred_fallthru
          _
        // Predicated region
        $region113: #{autoencoder_forward.1} parent=55 // pred_check
          %p1403 = pneg %p268
        $region114: #{autoencoder_forward.1} parent=55 // pred_check_branch
          %1405 = sbr.rel (%p1403) target = $region116
        $region115: #{autoencoder_forward.1} parent=55 // pred_region
          %s1406 = smul.u32 16, %s30
          %s1407 = ssub.s32 25, %s1406
          %p1408 = scmp.lt.s32.totalorder %s1407, 16
          %s1409 = scalar_select %p1408, %s1407, 16
          %s1410 = smul.u32 128, %s1409
          %s1412 = ssub.s32 2048, %s1410
          %1413 = vsyncadd %s1227, %s1412
          %p1414 = scmp.ne.s32.totalorder 0, %s1410
          %s1415 = smul.addr %s1406, 128
          %s1416 = scalar_lea.hbm %s10, %s1415
          %s1417 = smul.u32 8, %s1409
          %s1418 = sshll.u32 %s1230, 4
          %s1419 = int_to_ptr.vmem [resolvable:$true] %s1418
          %s1420 = sshll.u32 %s1417, 4
          %1424 = dma.vmem_to_hbm [thread:$0]  (%p1414), %s1419, %s1420, %s1416, %s1227, 128, 128, 8
        $region116: #{autoencoder_forward.1} parent=55 // pred_fallthru
          _
      $region56: #{autoencoder_forward.1} parent=5 // pred_fallthru
        _
      %p1425 = scmp.le.s32.totalorder 2, %s25
      // Predicated region
      $region117: #{autoencoder_forward.1} parent=5 // pred_check
        %p1426 = pneg %p1425
      $region118: #{autoencoder_forward.1} parent=5 // pred_check_branch
        %1428 = sbr.rel (%p1426) target = $region120
      $region119: #{autoencoder_forward.1} parent=5 // pred_region
        %s1429 = ssub.s32 %s25, 2
        // Predicated region
        $region121: #{autoencoder_forward.1} parent=119 // pred_check
          %p1430 = pneg %p248
        $region122: #{autoencoder_forward.1} parent=119 // pred_check_branch
          %1432 = sbr.rel (%p1430) target = $region124
        $region123: #{autoencoder_forward.1} parent=119 // pred_region
          %s1433 = sand.u32 %s233, 1
          %s1434 = sand.u32 %s233, 1
          %s1435 = smul.addr %s1434, 128
          %s1436 = scalar_lea.vmem [#allocation6], %s1435
        $region124: #{autoencoder_forward.1} parent=119 // pred_fallthru
          _
        // Predicated region
        $region125: #{autoencoder_forward.1} parent=119 // pred_check
          %p1437 = pneg %p274
        $region126: #{autoencoder_forward.1} parent=119 // pred_check_branch
          %1439 = sbr.rel (%p1437) target = $region128
        $region127: #{autoencoder_forward.1} parent=119 // pred_region
          %s1440 = sand.u32 %s259, 1
          %s1441 = scalar_lea.sflag [#allocation5], %s1440
          %s1442 = sand.u32 %s259, 1
          %s1443 = smul.addr %s1442, 128
          %s1444 = scalar_lea.vmem [#allocation7], %s1443
          %1445 = dma.done %s1441, 2048
        $region128: #{autoencoder_forward.1} parent=119 // pred_fallthru
          _
      $region120: #{autoencoder_forward.1} parent=5 // pred_fallthru
        _
    $region6: #{autoencoder_forward.1} parent=1 // loop_footer
      %s29 = sadd.s32 1, %s25
    $region7: #{autoencoder_forward.1} parent=1 // loop_footer_branch
      %24 = sbr.rel target = $region3
    $region8: #{autoencoder_forward.1} parent=1 // loop_exit
      _
    %1446 = vsyncpa [#allocation4], 1
    %s1447 = scalar_lea.sflag [#allocation4], 1
    %1448 = vsyncpa %s1447, 1
    %1449 = vsyncpa [#allocation5], 1
    %s1450 = scalar_lea.sflag [#allocation5], 1
    %1451 = vsyncpa %s1450, 1

</llo_original>
